<compile_context>
chip_gen: v6e
topology: v6e:2x2x1
jax: 0.10.0
libtpu: 0.0.40
codegen_flags: <defaults>
</compile_context>

<pallas_src>
import jax
import jax.numpy as jnp
from jax import lax
from jax.experimental import pallas as pl
from jax.experimental.pallas import tpu as pltpu

_BN_EPS = 1e-5


# ------------------------------ fused kernel --------------------------------

def _frru_fused_kernel(y_ref, zr_ref, w1y_ref, w1z_ref, s1_ref, sh1_ref,
                       w2_ref, s2_ref, sh2_ref, wr_ref, br_ref,
                       yp_ref, zo_ref,
                       ypad_ref, ppad_ref, y1pad_ref):
    """One batch element: pool -> conv1 -> conv2 -> conv_res + up + add."""
    H, W, Cout = yp_ref.shape
    Cy = y_ref.shape[-1]
    Cz = zr_ref.shape[-1]

    # ---- MaxPool2d(scale): max over the leading scale*scale axis -----------
    zr = zr_ref[...]                                    # (S2, H, W, Cz), f32
    pooled = jnp.max(zr, axis=0)                        # (H, W, Cz)

    # ---- zero-pad y and pooled-z into VMEM scratch (conv padding=1) --------
    # The channel concat of the PyTorch module is implicit: w1 is split along
    # Cin, so conv1 becomes two GEMMs accumulating into one f32 result.
    ypad_ref[...] = jnp.zeros_like(ypad_ref)
    ppad_ref[...] = jnp.zeros_like(ppad_ref)
    y1pad_ref[...] = jnp.zeros_like(y1pad_ref)
    ypad_ref[1:H + 1, 1:W + 1, :] = y_ref[...]
    ppad_ref[1:H + 1, 1:W + 1, :] = pooled

    def im2col(pad_ref, c):
        # (H+2, W+2, c) -> (H*W, 9*c), tap-major / channel-minor columns;
        # cast to bf16 only at the MXU input (epilogue stays f32).
        cols = [pad_ref[dh:dh + H, dw:dw + W, :].reshape(H * W, c)
                for dh in range(3) for dw in range(3)]
        return jnp.concatenate(cols, axis=-1).astype(jnp.bfloat16)

    # ---- conv1: one K=9*(Cy+Cz) GEMM (split weights) + folded BN + ReLU ----
    acc1 = jnp.dot(im2col(ypad_ref, Cy), w1y_ref[...],
                   preferred_element_type=jnp.float32)
    acc1 = acc1 + jnp.dot(im2col(ppad_ref, Cz), w1z_ref[...],
                          preferred_element_type=jnp.float32)
    s1, sh1 = s1_ref[...], sh1_ref[...]                 # (1, Cout), hoisted
    yp1 = jnp.maximum(acc1 * s1 + sh1, 0.0)             # (H*W, Cout), f32

    # ---- conv2: K=9*Cout GEMM on the VMEM-resident y' + folded BN + ReLU ---
    y1pad_ref[1:H + 1, 1:W + 1, :] = yp1.reshape(H, W, Cout)
    acc2 = jnp.dot(im2col(y1pad_ref, Cout), w2_ref[...],
                   preferred_element_type=jnp.float32)
    s2, sh2 = s2_ref[...], sh2_ref[...]
    yp2 = jnp.maximum(acc2 * s2 + sh2, 0.0)             # (H*W, Cout), f32

    yp_ref[...] = yp2.reshape(H, W, Cout).astype(yp_ref.dtype)

    # ---- conv_res (1x1, f32) + nearest upsample (broadcast) + residual -----
    res = jnp.dot(yp2, wr_ref[...], preferred_element_type=jnp.float32)
    res = (res + br_ref[...]).reshape(H, W, Cz)
    zo_ref[...] = (zr + res[None]).astype(zo_ref.dtype)


# ------------------------------- FRRU forward --------------------------------

def _fold_bn(gamma, beta, conv_bias):
    # eval-mode BN (mean=0, var=1) folded with the conv bias into scale/shift
    s = gamma / jnp.sqrt(1.0 + _BN_EPS)
    return s.reshape(1, -1), (beta + conv_bias * s).reshape(1, -1)


def frru_forward(y, z, params, scale):
    N, Cy, H, W = y.shape
    _, Cz, Hs, Ws = z.shape
    Cout = params["w1"].shape[-1]
    S2 = scale * scale

    y_h = jnp.transpose(y, (0, 2, 3, 1))                           # NHWC
    # z: (N, Cz, Hs, Ws) -> (N, scale*scale, H, W, Cz)
    z_r = (jnp.transpose(z, (0, 2, 3, 1))
           .reshape(N, H, scale, W, scale, Cz)
           .transpose(0, 2, 4, 1, 3, 5)
           .reshape(N, S2, H, W, Cz))

    s1, sh1 = _fold_bn(params["gamma1"], params["beta1"], params["b1"])
    s2, sh2 = _fold_bn(params["gamma2"], params["beta2"], params["b2"])

    # im2col-ordered, Cin-split conv weights; bf16 for the MXU.
    w1y = params["w1"][:, :, :Cy, :].reshape(9 * Cy, Cout).astype(jnp.bfloat16)
    w1z = params["w1"][:, :, Cy:, :].reshape(9 * Cz, Cout).astype(jnp.bfloat16)
    w2c = params["w2"].reshape(9 * Cout, Cout).astype(jnp.bfloat16)
    wr = params["wr"]
    br = params["br"].reshape(1, Cz)

    flops = 2 * N * H * W * (9 * (Cy + Cz) * Cout + 9 * Cout * Cout + Cout * Cz)
    bytes_accessed = (4 * (N * H * W * (Cy + Cout) + 2 * N * S2 * H * W * Cz)
                      + 2 * (w1y.size + w1z.size + w2c.size)
                      + 4 * (wr.size + br.size))

    yp_h, zo_r = pl.pallas_call(
        _frru_fused_kernel,
        out_shape=(jax.ShapeDtypeStruct((N, H, W, Cout), y.dtype),
                   jax.ShapeDtypeStruct((N, S2, H, W, Cz), z.dtype)),
        grid=(N,),
        in_specs=[
            pl.BlockSpec((None, H, W, Cy), lambda n: (n, 0, 0, 0)),
            pl.BlockSpec((None, S2, H, W, Cz), lambda n: (n, 0, 0, 0, 0)),
            pl.BlockSpec((9 * Cy, Cout), lambda n: (0, 0)),
            pl.BlockSpec((9 * Cz, Cout), lambda n: (0, 0)),
            pl.BlockSpec((1, Cout), lambda n: (0, 0)),
            pl.BlockSpec((1, Cout), lambda n: (0, 0)),
            pl.BlockSpec((9 * Cout, Cout), lambda n: (0, 0)),
            pl.BlockSpec((1, Cout), lambda n: (0, 0)),
            pl.BlockSpec((1, Cout), lambda n: (0, 0)),
            pl.BlockSpec((Cout, Cz), lambda n: (0, 0)),
            pl.BlockSpec((1, Cz), lambda n: (0, 0)),
        ],
        out_specs=(
            pl.BlockSpec((None, H, W, Cout), lambda n: (n, 0, 0, 0)),
            pl.BlockSpec((None, S2, H, W, Cz), lambda n: (n, 0, 0, 0, 0)),
        ),
        scratch_shapes=[
            pltpu.VMEM((H + 2, W + 2, Cy), jnp.float32),
            pltpu.VMEM((H + 2, W + 2, Cz), jnp.float32),
            pltpu.VMEM((H + 2, W + 2, Cout), jnp.float32),
        ],
        input_output_aliases={1: 1},           # z is updated in place
        compiler_params=pltpu.CompilerParams(
            dimension_semantics=("parallel",),
            vmem_limit_bytes=48 * 1024 * 1024),
        cost_estimate=pl.CostEstimate(flops=flops, transcendentals=0,
                                      bytes_accessed=bytes_accessed),
    )(y_h, z_r, w1y, w1z, s1, sh1, w2c, s2, sh2, wr, br)

    z_out = (zo_r.reshape(N, scale, scale, H, W, Cz)
             .transpose(0, 3, 1, 4, 2, 5)
             .reshape(N, Hs, Ws, Cz))
    return jnp.transpose(yp_h, (0, 3, 1, 2)), jnp.transpose(z_out, (0, 3, 1, 2))


# ---------------------------- pure-JAX reference -----------------------------

def frru_reference(y, z, params, scale):
    # Mirrors the kernel numerics: bf16 conv operands, f32 accumulation,
    # f32 BN/ReLU epilogue, f32 1x1 conv_res + residual add.
    N, Cy, H, W = y.shape
    Cz = z.shape[1]
    zp = z.reshape(N, Cz, H, scale, W, scale).max(axis=(3, 5))
    x = jnp.concatenate([y, zp], axis=1)

    def cbr(xx, w_hwio, bias, gamma, beta):
        out = lax.conv_general_dilated(
            xx.astype(jnp.bfloat16), w_hwio.astype(jnp.bfloat16),
            window_strides=(1, 1), padding="SAME",
            dimension_numbers=("NCHW", "HWIO", "NCHW"),
            preferred_element_type=jnp.float32)
        out = out + bias[None, :, None, None]
        out = out / jnp.sqrt(1.0 + _BN_EPS) * gamma[None, :, None, None] \
            + beta[None, :, None, None]
        return jnp.maximum(out, 0.0)

    yp = cbr(x, params["w1"], params["b1"], params["gamma1"], params["beta1"])
    yp = cbr(yp, params["w2"], params["b2"], params["gamma2"], params["beta2"])
    res = jnp.einsum("nchw,cd->ndhw", yp, params["wr"]) \
        + params["br"][None, :, None, None]
    res_up = jnp.repeat(jnp.repeat(res, scale, axis=2), scale, axis=3)
    return yp, z + res_up


# --------------------------------- main ---------------------------------------

def init_params(key, prev_channels, out_channels):
    cin1 = prev_channels + 32
    ks = jax.random.split(key, 10)
    f32 = jnp.float32
    return {
        "w1": 0.1 * jax.random.normal(ks[0], (3, 3, cin1, out_channels), f32),
        "b1": 0.1 * jax.random.normal(ks[1], (out_channels,), f32),
        "gamma1": 1.0 + 0.1 * jax.random.normal(ks[2], (out_channels,), f32),
        "beta1": 0.1 * jax.random.normal(ks[3], (out_channels,), f32),
        "w2": 0.1 * jax.random.normal(ks[4], (3, 3, out_channels, out_channels), f32),
        "b2": 0.1 * jax.random.normal(ks[5], (out_channels,), f32),
        "gamma2": 1.0 + 0.1 * jax.random.normal(ks[6], (out_channels,), f32),
        "beta2": 0.1 * jax.random.normal(ks[7], (out_channels,), f32),
        "wr": 0.1 * jax.random.normal(ks[8], (out_channels, 32), f32),
        "br": 0.1 * jax.random.normal(ks[9], (32,), f32),
    }


if __name__ == "__main__":
    scale = 2
    prev_channels, out_channels = 4, 8
    N, H, W = 2, 8, 8
    Hs, Ws = H * scale, W * scale

    key = jax.random.PRNGKey(0)
    ky, kz, kp = jax.random.split(key, 3)
    y = jax.random.normal(ky, (N, prev_channels, H, W), jnp.float32)
    z = jax.random.normal(kz, (N, 32, Hs, Ws), jnp.float32)
    params = init_params(kp, prev_channels, out_channels)

    fwd = jax.jit(frru_forward, static_argnums=3)
    y_prime, z_prime = fwd(y, z, params, scale)
    jax.block_until_ready((y_prime, z_prime))

    y_ref, z_ref = frru_reference(y, z, params, scale)
    assert y_prime.shape == (N, out_channels, H, W)
    assert z_prime.shape == (N, 32, Hs, Ws)
    # tolerance covers bf16 MXU-input rounding / accumulation-order differences
    assert jnp.allclose(y_prime, y_ref, atol=1e-2, rtol=1e-2), "y_prime mismatch"
    assert jnp.allclose(z_prime, z_ref, atol=1e-2, rtol=1e-2), "z_prime mismatch"

    print("KERNEL_OK")
</pallas_src>

<mosaic_0001>
module attributes {stable_mosaic.version = 11 : i64} {
  func.func @_frru_fused_kernel(%arg0: i32, %arg1: memref<1x8x8x4xf32, #tpu.memory_space<vmem>>, %arg2: memref<1x4x8x8x32xf32, #tpu.memory_space<vmem>>, %arg3: memref<36x8xbf16, #tpu.memory_space<vmem>>, %arg4: memref<288x8xbf16, #tpu.memory_space<vmem>>, %arg5: memref<1x8xf32, #tpu.memory_space<vmem>>, %arg6: memref<1x8xf32, #tpu.memory_space<vmem>>, %arg7: memref<72x8xbf16, #tpu.memory_space<vmem>>, %arg8: memref<1x8xf32, #tpu.memory_space<vmem>>, %arg9: memref<1x8xf32, #tpu.memory_space<vmem>>, %arg10: memref<8x32xf32, #tpu.memory_space<vmem>>, %arg11: memref<1x32xf32, #tpu.memory_space<vmem>>, %arg12: memref<1x8x8x8xf32, #tpu.memory_space<vmem>>, %arg13: memref<1x4x8x8x32xf32, #tpu.memory_space<vmem>>, %arg14: memref<10x10x4xf32, #tpu.memory_space<vmem>>, %arg15: memref<10x10x32xf32, #tpu.memory_space<vmem>>, %arg16: memref<10x10x8xf32, #tpu.memory_space<vmem>>) attributes {dimension_semantics = [#tpu.dimension_semantics<parallel>], iteration_bounds = array<i64: 2>, scalar_prefetch = 0 : i64, scratch_operands = 3 : i64, tpu.core_type = #tpu.core_type<tc>, window_params = [{transform_indices = @transform_0, window_bounds = array<i64: 1, 8, 8, 4>}, {transform_indices = @transform_1, window_bounds = array<i64: 1, 4, 8, 8, 32>}, {pipeline_mode = #tpu.pipeline_mode<synchronous>, transform_indices = @transform_2, window_bounds = array<i64: 36, 8>}, {pipeline_mode = #tpu.pipeline_mode<synchronous>, transform_indices = @transform_3, window_bounds = array<i64: 288, 8>}, {pipeline_mode = #tpu.pipeline_mode<synchronous>, transform_indices = @transform_4, window_bounds = array<i64: 1, 8>}, {pipeline_mode = #tpu.pipeline_mode<synchronous>, transform_indices = @transform_5, window_bounds = array<i64: 1, 8>}, {pipeline_mode = #tpu.pipeline_mode<synchronous>, transform_indices = @transform_6, window_bounds = array<i64: 72, 8>}, {pipeline_mode = #tpu.pipeline_mode<synchronous>, transform_indices = @transform_7, window_bounds = array<i64: 1, 8>}, {pipeline_mode = #tpu.pipeline_mode<synchronous>, transform_indices = @transform_8, window_bounds = array<i64: 1, 8>}, {pipeline_mode = #tpu.pipeline_mode<synchronous>, transform_indices = @transform_9, window_bounds = array<i64: 8, 32>}, {pipeline_mode = #tpu.pipeline_mode<synchronous>, transform_indices = @transform_10, window_bounds = array<i64: 1, 32>}, {transform_indices = @transform_11, window_bounds = array<i64: 1, 8, 8, 8>}, {transform_indices = @transform_12, window_bounds = array<i64: 1, 4, 8, 8, 32>}]} {
    %c0 = arith.constant 0 : index
    %c0_0 = arith.constant 0 : index
    %c0_1 = arith.constant 0 : index
    %c0_2 = arith.constant 0 : index
    %c0_3 = arith.constant 0 : index
    %0 = vector.load %arg2[%c0, %c0_0, %c0_1, %c0_2, %c0_3] : memref<1x4x8x8x32xf32, #tpu.memory_space<vmem>>, vector<1x4x8x8x32xf32>
    %1 = vector.shape_cast %0 : vector<1x4x8x8x32xf32> to vector<4x8x8x32xf32>
    %cst = arith.constant dense<0xFF800000> : vector<8x8x32xf32>
    %2 = vector.multi_reduction <maximumf>, %1, %cst [0] : vector<4x8x8x32xf32> to vector<8x8x32xf32>
    %cst_4 = arith.constant 0.000000e+00 : f32
    %3 = vector.broadcast %cst_4 : f32 to vector<10x10x4xf32>
    %c0_5 = arith.constant 0 : index
    %c0_6 = arith.constant 0 : index
    %c0_7 = arith.constant 0 : index
    %4 = vector.load %arg14[%c0_5, %c0_6, %c0_7] : memref<10x10x4xf32, #tpu.memory_space<vmem>>, vector<10x10x4xf32>
    tpu.vector_store %arg14[%c0_5, %c0_6, %c0_7], %3 {strides = array<i32>} : memref<10x10x4xf32, #tpu.memory_space<vmem>>, vector<10x10x4xf32>,
    %cst_8 = arith.constant 0.000000e+00 : f32
    %5 = vector.broadcast %cst_8 : f32 to vector<10x10x32xf32>
    %c0_9 = arith.constant 0 : index
    %c0_10 = arith.constant 0 : index
    %c0_11 = arith.constant 0 : index
    %6 = vector.load %arg15[%c0_9, %c0_10, %c0_11] : memref<10x10x32xf32, #tpu.memory_space<vmem>>, vector<10x10x32xf32>
    tpu.vector_store %arg15[%c0_9, %c0_10, %c0_11], %5 {strides = array<i32>} : memref<10x10x32xf32, #tpu.memory_space<vmem>>, vector<10x10x32xf32>,
    %cst_12 = arith.constant 0.000000e+00 : f32
    %7 = vector.broadcast %cst_12 : f32 to vector<10x10x8xf32>
    %c0_13 = arith.constant 0 : index
    %c0_14 = arith.constant 0 : index
    %c0_15 = arith.constant 0 : index
    %8 = vector.load %arg16[%c0_13, %c0_14, %c0_15] : memref<10x10x8xf32, #tpu.memory_space<vmem>>, vector<10x10x8xf32>
    tpu.vector_store %arg16[%c0_13, %c0_14, %c0_15], %7 {strides = array<i32>} : memref<10x10x8xf32, #tpu.memory_space<vmem>>, vector<10x10x8xf32>,
    %c0_16 = arith.constant 0 : index
    %c0_17 = arith.constant 0 : index
    %c0_18 = arith.constant 0 : index
    %c0_19 = arith.constant 0 : index
    %9 = vector.load %arg1[%c0_16, %c0_17, %c0_18, %c0_19] : memref<1x8x8x4xf32, #tpu.memory_space<vmem>>, vector<1x8x8x4xf32>
    %10 = vector.shape_cast %9 : vector<1x8x8x4xf32> to vector<8x8x4xf32>
    %c1 = arith.constant 1 : index
    %c1_20 = arith.constant 1 : index
    %c0_21 = arith.constant 0 : index
    %11 = vector.load %arg14[%c1, %c1_20, %c0_21] : memref<10x10x4xf32, #tpu.memory_space<vmem>>, vector<8x8x4xf32>
    tpu.vector_store %arg14[%c1, %c1_20, %c0_21], %10 {strides = array<i32>} : memref<10x10x4xf32, #tpu.memory_space<vmem>>, vector<8x8x4xf32>,
    %c1_22 = arith.constant 1 : index
    %c1_23 = arith.constant 1 : index
    %c0_24 = arith.constant 0 : index
    %12 = vector.load %arg15[%c1_22, %c1_23, %c0_24] : memref<10x10x32xf32, #tpu.memory_space<vmem>>, vector<8x8x32xf32>
    tpu.vector_store %arg15[%c1_22, %c1_23, %c0_24], %2 {strides = array<i32>} : memref<10x10x32xf32, #tpu.memory_space<vmem>>, vector<8x8x32xf32>,
    %c0_25 = arith.constant 0 : index
    %c0_26 = arith.constant 0 : index
    %c0_27 = arith.constant 0 : index
    %13 = vector.load %arg14[%c0_25, %c0_26, %c0_27] : memref<10x10x4xf32, #tpu.memory_space<vmem>>, vector<8x8x4xf32>
    %14 = vector.shape_cast %13 : vector<8x8x4xf32> to vector<64x4xf32>
    %c0_28 = arith.constant 0 : index
    %c1_29 = arith.constant 1 : index
    %c0_30 = arith.constant 0 : index
    %15 = vector.load %arg14[%c0_28, %c1_29, %c0_30] : memref<10x10x4xf32, #tpu.memory_space<vmem>>, vector<8x8x4xf32>
    %16 = vector.shape_cast %15 : vector<8x8x4xf32> to vector<64x4xf32>
    %c0_31 = arith.constant 0 : index
    %c2 = arith.constant 2 : index
    %c0_32 = arith.constant 0 : index
    %17 = vector.load %arg14[%c0_31, %c2, %c0_32] : memref<10x10x4xf32, #tpu.memory_space<vmem>>, vector<8x8x4xf32>
    %18 = vector.shape_cast %17 : vector<8x8x4xf32> to vector<64x4xf32>
    %c1_33 = arith.constant 1 : index
    %c0_34 = arith.constant 0 : index
    %c0_35 = arith.constant 0 : index
    %19 = vector.load %arg14[%c1_33, %c0_34, %c0_35] : memref<10x10x4xf32, #tpu.memory_space<vmem>>, vector<8x8x4xf32>
    %20 = vector.shape_cast %19 : vector<8x8x4xf32> to vector<64x4xf32>
    %c1_36 = arith.constant 1 : index
    %c1_37 = arith.constant 1 : index
    %c0_38 = arith.constant 0 : index
    %21 = vector.load %arg14[%c1_36, %c1_37, %c0_38] : memref<10x10x4xf32, #tpu.memory_space<vmem>>, vector<8x8x4xf32>
    %22 = vector.shape_cast %21 : vector<8x8x4xf32> to vector<64x4xf32>
    %c1_39 = arith.constant 1 : index
    %c2_40 = arith.constant 2 : index
    %c0_41 = arith.constant 0 : index
    %23 = vector.load %arg14[%c1_39, %c2_40, %c0_41] : memref<10x10x4xf32, #tpu.memory_space<vmem>>, vector<8x8x4xf32>
    %24 = vector.shape_cast %23 : vector<8x8x4xf32> to vector<64x4xf32>
    %c2_42 = arith.constant 2 : index
    %c0_43 = arith.constant 0 : index
    %c0_44 = arith.constant 0 : index
    %25 = vector.load %arg14[%c2_42, %c0_43, %c0_44] : memref<10x10x4xf32, #tpu.memory_space<vmem>>, vector<8x8x4xf32>
    %26 = vector.shape_cast %25 : vector<8x8x4xf32> to vector<64x4xf32>
    %c2_45 = arith.constant 2 : index
    %c1_46 = arith.constant 1 : index
    %c0_47 = arith.constant 0 : index
    %27 = vector.load %arg14[%c2_45, %c1_46, %c0_47] : memref<10x10x4xf32, #tpu.memory_space<vmem>>, vector<8x8x4xf32>
    %28 = vector.shape_cast %27 : vector<8x8x4xf32> to vector<64x4xf32>
    %c2_48 = arith.constant 2 : index
    %c2_49 = arith.constant 2 : index
    %c0_50 = arith.constant 0 : index
    %29 = vector.load %arg14[%c2_48, %c2_49, %c0_50] : memref<10x10x4xf32, #tpu.memory_space<vmem>>, vector<8x8x4xf32>
    %30 = vector.shape_cast %29 : vector<8x8x4xf32> to vector<64x4xf32>
    %31 = tpu.concatenate %14, %16, %18, %20, %22, %24, %26, %28, %30 in 1 : vector<64x4xf32>, vector<64x4xf32>, vector<64x4xf32>, vector<64x4xf32>, vector<64x4xf32>, vector<64x4xf32>, vector<64x4xf32>, vector<64x4xf32>, vector<64x4xf32> -> vector<64x36xf32>
    %32 = arith.truncf %31 : vector<64x36xf32> to vector<64x36xbf16>
    %c0_51 = arith.constant 0 : index
    %c0_52 = arith.constant 0 : index
    %33 = vector.load %arg3[%c0_51, %c0_52] : memref<36x8xbf16, #tpu.memory_space<vmem>>, vector<36x8xbf16>
    %cst_53 = arith.constant dense<0.000000e+00> : vector<64x8xf32>
    %34 = tpu.matmul %32, %33, %cst_53 {dimension_numbers = #tpu.dot_dimension_numbers<[1], [0], [0], [1], [0, 0, 1, 1], [], []>} : vector<64x36xbf16>, vector<36x8xbf16>, vector<64x8xf32> -> vector<64x8xf32>
    %c0_54 = arith.constant 0 : index
    %c0_55 = arith.constant 0 : index
    %c0_56 = arith.constant 0 : index
    %35 = vector.load %arg15[%c0_54, %c0_55, %c0_56] : memref<10x10x32xf32, #tpu.memory_space<vmem>>, vector<8x8x32xf32>
    %36 = vector.shape_cast %35 : vector<8x8x32xf32> to vector<64x32xf32>
    %c0_57 = arith.constant 0 : index
    %c1_58 = arith.constant 1 : index
    %c0_59 = arith.constant 0 : index
    %37 = vector.load %arg15[%c0_57, %c1_58, %c0_59] : memref<10x10x32xf32, #tpu.memory_space<vmem>>, vector<8x8x32xf32>
    %38 = vector.shape_cast %37 : vector<8x8x32xf32> to vector<64x32xf32>
    %c0_60 = arith.constant 0 : index
    %c2_61 = arith.constant 2 : index
    %c0_62 = arith.constant 0 : index
    %39 = vector.load %arg15[%c0_60, %c2_61, %c0_62] : memref<10x10x32xf32, #tpu.memory_space<vmem>>, vector<8x8x32xf32>
    %40 = vector.shape_cast %39 : vector<8x8x32xf32> to vector<64x32xf32>
    %c1_63 = arith.constant 1 : index
    %c0_64 = arith.constant 0 : index
    %c0_65 = arith.constant 0 : index
    %41 = vector.load %arg15[%c1_63, %c0_64, %c0_65] : memref<10x10x32xf32, #tpu.memory_space<vmem>>, vector<8x8x32xf32>
    %42 = vector.shape_cast %41 : vector<8x8x32xf32> to vector<64x32xf32>
    %c1_66 = arith.constant 1 : index
    %c1_67 = arith.constant 1 : index
    %c0_68 = arith.constant 0 : index
    %43 = vector.load %arg15[%c1_66, %c1_67, %c0_68] : memref<10x10x32xf32, #tpu.memory_space<vmem>>, vector<8x8x32xf32>
    %44 = vector.shape_cast %43 : vector<8x8x32xf32> to vector<64x32xf32>
    %c1_69 = arith.constant 1 : index
    %c2_70 = arith.constant 2 : index
    %c0_71 = arith.constant 0 : index
    %45 = vector.load %arg15[%c1_69, %c2_70, %c0_71] : memref<10x10x32xf32, #tpu.memory_space<vmem>>, vector<8x8x32xf32>
    %46 = vector.shape_cast %45 : vector<8x8x32xf32> to vector<64x32xf32>
    %c2_72 = arith.constant 2 : index
    %c0_73 = arith.constant 0 : index
    %c0_74 = arith.constant 0 : index
    %47 = vector.load %arg15[%c2_72, %c0_73, %c0_74] : memref<10x10x32xf32, #tpu.memory_space<vmem>>, vector<8x8x32xf32>
    %48 = vector.shape_cast %47 : vector<8x8x32xf32> to vector<64x32xf32>
    %c2_75 = arith.constant 2 : index
    %c1_76 = arith.constant 1 : index
    %c0_77 = arith.constant 0 : index
    %49 = vector.load %arg15[%c2_75, %c1_76, %c0_77] : memref<10x10x32xf32, #tpu.memory_space<vmem>>, vector<8x8x32xf32>
    %50 = vector.shape_cast %49 : vector<8x8x32xf32> to vector<64x32xf32>
    %c2_78 = arith.constant 2 : index
    %c2_79 = arith.constant 2 : index
    %c0_80 = arith.constant 0 : index
    %51 = vector.load %arg15[%c2_78, %c2_79, %c0_80] : memref<10x10x32xf32, #tpu.memory_space<vmem>>, vector<8x8x32xf32>
    %52 = vector.shape_cast %51 : vector<8x8x32xf32> to vector<64x32xf32>
    %53 = tpu.concatenate %36, %38, %40, %42, %44, %46, %48, %50, %52 in 1 : vector<64x32xf32>, vector<64x32xf32>, vector<64x32xf32>, vector<64x32xf32>, vector<64x32xf32>, vector<64x32xf32>, vector<64x32xf32>, vector<64x32xf32>, vector<64x32xf32> -> vector<64x288xf32>
    %54 = arith.truncf %53 : vector<64x288xf32> to vector<64x288xbf16>
    %c0_81 = arith.constant 0 : index
    %c0_82 = arith.constant 0 : index
    %55 = vector.load %arg4[%c0_81, %c0_82] : memref<288x8xbf16, #tpu.memory_space<vmem>>, vector<288x8xbf16>
    %cst_83 = arith.constant dense<0.000000e+00> : vector<64x8xf32>
    %56 = tpu.matmul %54, %55, %cst_83 {dimension_numbers = #tpu.dot_dimension_numbers<[1], [0], [0], [1], [0, 0, 1, 1], [], []>} : vector<64x288xbf16>, vector<288x8xbf16>, vector<64x8xf32> -> vector<64x8xf32>
    %57 = arith.addf %34, %56 : vector<64x8xf32>
    %c0_84 = arith.constant 0 : index
    %c0_85 = arith.constant 0 : index
    %58 = vector.load %arg5[%c0_84, %c0_85] : memref<1x8xf32, #tpu.memory_space<vmem>>, vector<1x8xf32>
    %c0_86 = arith.constant 0 : index
    %c0_87 = arith.constant 0 : index
    %59 = vector.load %arg6[%c0_86, %c0_87] : memref<1x8xf32, #tpu.memory_space<vmem>>, vector<1x8xf32>
    %60 = vector.broadcast %58 : vector<1x8xf32> to vector<64x8xf32>
    %61 = arith.mulf %57, %60 : vector<64x8xf32>
    %62 = vector.broadcast %59 : vector<1x8xf32> to vector<64x8xf32>
    %63 = arith.addf %61, %62 : vector<64x8xf32>
    %cst_88 = arith.constant 0.000000e+00 : f32
    %64 = vector.broadcast %cst_88 : f32 to vector<64x8xf32>
    %65 = arith.maximumf %63, %64 : vector<64x8xf32>
    %66 = vector.shape_cast %65 : vector<64x8xf32> to vector<8x8x8xf32>
    %c1_89 = arith.constant 1 : index
    %c1_90 = arith.constant 1 : index
    %c0_91 = arith.constant 0 : index
    %67 = vector.load %arg16[%c1_89, %c1_90, %c0_91] : memref<10x10x8xf32, #tpu.memory_space<vmem>>, vector<8x8x8xf32>
    tpu.vector_store %arg16[%c1_89, %c1_90, %c0_91], %66 {strides = array<i32>} : memref<10x10x8xf32, #tpu.memory_space<vmem>>, vector<8x8x8xf32>,
    %c0_92 = arith.constant 0 : index
    %c0_93 = arith.constant 0 : index
    %c0_94 = arith.constant 0 : index
    %68 = vector.load %arg16[%c0_92, %c0_93, %c0_94] : memref<10x10x8xf32, #tpu.memory_space<vmem>>, vector<8x8x8xf32>
    %69 = vector.shape_cast %68 : vector<8x8x8xf32> to vector<64x8xf32>
    %c0_95 = arith.constant 0 : index
    %c1_96 = arith.constant 1 : index
    %c0_97 = arith.constant 0 : index
    %70 = vector.load %arg16[%c0_95, %c1_96, %c0_97] : memref<10x10x8xf32, #tpu.memory_space<vmem>>, vector<8x8x8xf32>
    %71 = vector.shape_cast %70 : vector<8x8x8xf32> to vector<64x8xf32>
    %c0_98 = arith.constant 0 : index
    %c2_99 = arith.constant 2 : index
    %c0_100 = arith.constant 0 : index
    %72 = vector.load %arg16[%c0_98, %c2_99, %c0_100] : memref<10x10x8xf32, #tpu.memory_space<vmem>>, vector<8x8x8xf32>
    %73 = vector.shape_cast %72 : vector<8x8x8xf32> to vector<64x8xf32>
    %c1_101 = arith.constant 1 : index
    %c0_102 = arith.constant 0 : index
    %c0_103 = arith.constant 0 : index
    %74 = vector.load %arg16[%c1_101, %c0_102, %c0_103] : memref<10x10x8xf32, #tpu.memory_space<vmem>>, vector<8x8x8xf32>
    %75 = vector.shape_cast %74 : vector<8x8x8xf32> to vector<64x8xf32>
    %c1_104 = arith.constant 1 : index
    %c1_105 = arith.constant 1 : index
    %c0_106 = arith.constant 0 : index
    %76 = vector.load %arg16[%c1_104, %c1_105, %c0_106] : memref<10x10x8xf32, #tpu.memory_space<vmem>>, vector<8x8x8xf32>
    %77 = vector.shape_cast %76 : vector<8x8x8xf32> to vector<64x8xf32>
    %c1_107 = arith.constant 1 : index
    %c2_108 = arith.constant 2 : index
    %c0_109 = arith.constant 0 : index
    %78 = vector.load %arg16[%c1_107, %c2_108, %c0_109] : memref<10x10x8xf32, #tpu.memory_space<vmem>>, vector<8x8x8xf32>
    %79 = vector.shape_cast %78 : vector<8x8x8xf32> to vector<64x8xf32>
    %c2_110 = arith.constant 2 : index
    %c0_111 = arith.constant 0 : index
    %c0_112 = arith.constant 0 : index
    %80 = vector.load %arg16[%c2_110, %c0_111, %c0_112] : memref<10x10x8xf32, #tpu.memory_space<vmem>>, vector<8x8x8xf32>
    %81 = vector.shape_cast %80 : vector<8x8x8xf32> to vector<64x8xf32>
    %c2_113 = arith.constant 2 : index
    %c1_114 = arith.constant 1 : index
    %c0_115 = arith.constant 0 : index
    %82 = vector.load %arg16[%c2_113, %c1_114, %c0_115] : memref<10x10x8xf32, #tpu.memory_space<vmem>>, vector<8x8x8xf32>
    %83 = vector.shape_cast %82 : vector<8x8x8xf32> to vector<64x8xf32>
    %c2_116 = arith.constant 2 : index
    %c2_117 = arith.constant 2 : index
    %c0_118 = arith.constant 0 : index
    %84 = vector.load %arg16[%c2_116, %c2_117, %c0_118] : memref<10x10x8xf32, #tpu.memory_space<vmem>>, vector<8x8x8xf32>
    %85 = vector.shape_cast %84 : vector<8x8x8xf32> to vector<64x8xf32>
    %86 = tpu.concatenate %69, %71, %73, %75, %77, %79, %81, %83, %85 in 1 : vector<64x8xf32>, vector<64x8xf32>, vector<64x8xf32>, vector<64x8xf32>, vector<64x8xf32>, vector<64x8xf32>, vector<64x8xf32>, vector<64x8xf32>, vector<64x8xf32> -> vector<64x72xf32>
    %87 = arith.truncf %86 : vector<64x72xf32> to vector<64x72xbf16>
    %c0_119 = arith.constant 0 : index
    %c0_120 = arith.constant 0 : index
    %88 = vector.load %arg7[%c0_119, %c0_120] : memref<72x8xbf16, #tpu.memory_space<vmem>>, vector<72x8xbf16>
    %cst_121 = arith.constant dense<0.000000e+00> : vector<64x8xf32>
    %89 = tpu.matmul %87, %88, %cst_121 {dimension_numbers = #tpu.dot_dimension_numbers<[1], [0], [0], [1], [0, 0, 1, 1], [], []>} : vector<64x72xbf16>, vector<72x8xbf16>, vector<64x8xf32> -> vector<64x8xf32>
    %c0_122 = arith.constant 0 : index
    %c0_123 = arith.constant 0 : index
    %90 = vector.load %arg8[%c0_122, %c0_123] : memref<1x8xf32, #tpu.memory_space<vmem>>, vector<1x8xf32>
    %c0_124 = arith.constant 0 : index
    %c0_125 = arith.constant 0 : index
    %91 = vector.load %arg9[%c0_124, %c0_125] : memref<1x8xf32, #tpu.memory_space<vmem>>, vector<1x8xf32>
    %92 = vector.broadcast %90 : vector<1x8xf32> to vector<64x8xf32>
    %93 = arith.mulf %89, %92 : vector<64x8xf32>
    %94 = vector.broadcast %91 : vector<1x8xf32> to vector<64x8xf32>
    %95 = arith.addf %93, %94 : vector<64x8xf32>
    %cst_126 = arith.constant 0.000000e+00 : f32
    %96 = vector.broadcast %cst_126 : f32 to vector<64x8xf32>
    %97 = arith.maximumf %95, %96 : vector<64x8xf32>
    %98 = vector.shape_cast %97 : vector<64x8xf32> to vector<8x8x8xf32>
    %c0_127 = arith.constant 0 : index
    %c0_128 = arith.constant 0 : index
    %c0_129 = arith.constant 0 : index
    %c0_130 = arith.constant 0 : index
    %99 = vector.load %arg12[%c0_127, %c0_128, %c0_129, %c0_130] : memref<1x8x8x8xf32, #tpu.memory_space<vmem>>, vector<1x8x8x8xf32>
    %100 = vector.shape_cast %99 : vector<1x8x8x8xf32> to vector<8x8x8xf32>
    %101 = vector.shape_cast %98 : vector<8x8x8xf32> to vector<1x8x8x8xf32>
    tpu.vector_store %arg12[%c0_127, %c0_128, %c0_129, %c0_130], %101 {strides = array<i32>} : memref<1x8x8x8xf32, #tpu.memory_space<vmem>>, vector<1x8x8x8xf32>,
    %c0_131 = arith.constant 0 : index
    %c0_132 = arith.constant 0 : index
    %102 = vector.load %arg10[%c0_131, %c0_132] : memref<8x32xf32, #tpu.memory_space<vmem>>, vector<8x32xf32>
    %cst_133 = arith.constant dense<0.000000e+00> : vector<64x32xf32>
    %103 = tpu.matmul %97, %102, %cst_133 {dimension_numbers = #tpu.dot_dimension_numbers<[1], [0], [0], [1], [0, 0, 1, 1], [], []>} : vector<64x8xf32>, vector<8x32xf32>, vector<64x32xf32> -> vector<64x32xf32>
    %c0_134 = arith.constant 0 : index
    %c0_135 = arith.constant 0 : index
    %104 = vector.load %arg11[%c0_134, %c0_135] : memref<1x32xf32, #tpu.memory_space<vmem>>, vector<1x32xf32>
    %105 = vector.broadcast %104 : vector<1x32xf32> to vector<64x32xf32>
    %106 = arith.addf %103, %105 : vector<64x32xf32>
    %107 = vector.shape_cast %106 : vector<64x32xf32> to vector<8x8x32xf32>
    %108 = vector.shape_cast %107 : vector<8x8x32xf32> to vector<1x8x8x32xf32>
    %109 = vector.broadcast %108 : vector<1x8x8x32xf32> to vector<4x8x8x32xf32>
    %110 = arith.addf %1, %109 : vector<4x8x8x32xf32>
    %c0_136 = arith.constant 0 : index
    %c0_137 = arith.constant 0 : index
    %c0_138 = arith.constant 0 : index
    %c0_139 = arith.constant 0 : index
    %c0_140 = arith.constant 0 : index
    %111 = vector.load %arg13[%c0_136, %c0_137, %c0_138, %c0_139, %c0_140] : memref<1x4x8x8x32xf32, #tpu.memory_space<vmem>>, vector<1x4x8x8x32xf32>
    %112 = vector.shape_cast %111 : vector<1x4x8x8x32xf32> to vector<4x8x8x32xf32>
    %113 = vector.shape_cast %110 : vector<4x8x8x32xf32> to vector<1x4x8x8x32xf32>
    tpu.vector_store %arg13[%c0_136, %c0_137, %c0_138, %c0_139, %c0_140], %113 {strides = array<i32>} : memref<1x4x8x8x32xf32, #tpu.memory_space<vmem>>, vector<1x4x8x8x32xf32>,
    return
  }
  func.func @transform_0(%arg0: i32) -> (i32, i32, i32, i32) {
    %c0_i32 = arith.constant 0 : i32
    %c0_i32_0 = arith.constant 0 : i32
    %c0_i32_1 = arith.constant 0 : i32
    %c0_i32_2 = arith.constant 0 : i32
    return %arg0, %c0_i32, %c0_i32_0, %c0_i32_1 : i32, i32, i32, i32
  }
  func.func @transform_1(%arg0: i32) -> (i32, i32, i32, i32, i32) {
    %c0_i32 = arith.constant 0 : i32
    %c0_i32_0 = arith.constant 0 : i32
    %c0_i32_1 = arith.constant 0 : i32
    %c0_i32_2 = arith.constant 0 : i32
    %c0_i32_3 = arith.constant 0 : i32
    return %arg0, %c0_i32, %c0_i32_0, %c0_i32_1, %c0_i32_2 : i32, i32, i32, i32, i32
  }
  func.func @transform_2(%arg0: i32) -> (i32, i32) {
    %c0_i32 = arith.constant 0 : i32
    %c0_i32_0 = arith.constant 0 : i32
    %c0_i32_1 = arith.constant 0 : i32
    return %c0_i32, %c0_i32_0 : i32, i32
  }
  func.func @transform_3(%arg0: i32) -> (i32, i32) {
    %c0_i32 = arith.constant 0 : i32
    %c0_i32_0 = arith.constant 0 : i32
    %c0_i32_1 = arith.constant 0 : i32
    return %c0_i32, %c0_i32_0 : i32, i32
  }
  func.func @transform_4(%arg0: i32) -> (i32, i32) {
    %c0_i32 = arith.constant 0 : i32
    %c0_i32_0 = arith.constant 0 : i32
    %c0_i32_1 = arith.constant 0 : i32
    return %c0_i32, %c0_i32_0 : i32, i32
  }
  func.func @transform_5(%arg0: i32) -> (i32, i32) {
    %c0_i32 = arith.constant 0 : i32
    %c0_i32_0 = arith.constant 0 : i32
    %c0_i32_1 = arith.constant 0 : i32
    return %c0_i32, %c0_i32_0 : i32, i32
  }
  func.func @transform_6(%arg0: i32) -> (i32, i32) {
    %c0_i32 = arith.constant 0 : i32
    %c0_i32_0 = arith.constant 0 : i32
    %c0_i32_1 = arith.constant 0 : i32
    return %c0_i32, %c0_i32_0 : i32, i32
  }
  func.func @transform_7(%arg0: i32) -> (i32, i32) {
    %c0_i32 = arith.constant 0 : i32
    %c0_i32_0 = arith.constant 0 : i32
    %c0_i32_1 = arith.constant 0 : i32
    return %c0_i32, %c0_i32_0 : i32, i32
  }
  func.func @transform_8(%arg0: i32) -> (i32, i32) {
    %c0_i32 = arith.constant 0 : i32
    %c0_i32_0 = arith.constant 0 : i32
    %c0_i32_1 = arith.constant 0 : i32
    return %c0_i32, %c0_i32_0 : i32, i32
  }
  func.func @transform_9(%arg0: i32) -> (i32, i32) {
    %c0_i32 = arith.constant 0 : i32
    %c0_i32_0 = arith.constant 0 : i32
    %c0_i32_1 = arith.constant 0 : i32
    return %c0_i32, %c0_i32_0 : i32, i32
  }
  func.func @transform_10(%arg0: i32) -> (i32, i32) {
    %c0_i32 = arith.constant 0 : i32
    %c0_i32_0 = arith.constant 0 : i32
    %c0_i32_1 = arith.constant 0 : i32
    return %c0_i32, %c0_i32_0 : i32, i32
  }
  func.func @transform_11(%arg0: i32) -> (i32, i32, i32, i32) {
    %c0_i32 = arith.constant 0 : i32
    %c0_i32_0 = arith.constant 0 : i32
    %c0_i32_1 = arith.constant 0 : i32
    %c0_i32_2 = arith.constant 0 : i32
    return %arg0, %c0_i32, %c0_i32_0, %c0_i32_1 : i32, i32, i32, i32
  }
  func.func @transform_12(%arg0: i32) -> (i32, i32, i32, i32, i32) {
    %c0_i32 = arith.constant 0 : i32
    %c0_i32_0 = arith.constant 0 : i32
    %c0_i32_1 = arith.constant 0 : i32
    %c0_i32_2 = arith.constant 0 : i32
    %c0_i32_3 = arith.constant 0 : i32
    return %arg0, %c0_i32, %c0_i32_0, %c0_i32_1, %c0_i32_2 : i32, i32, i32, i32, i32
  }
}

</mosaic_0001>

<llo_original>
// kernel: frru_forward.1
$region0: #{frru_forward.1}
  #allocation0 [shape = 'u32[]', space=smem, size = 0x4, offset = 0x4, fixed_abs, tag = 'smem constant byte address 0x4 - core index']
  #allocation1 [shape = 'u32[144,128]{1,0:T(1,128)}', space=vmem, size = 0x12000, scoped, tag = 'internal scratch']
  #allocation2 [shape = 'f32[10,10,4]{2,1,0:T(8,128)}', space=vmem, size = 0x14000, scoped, tag = 'scratch operand']
  #allocation3 [shape = 'f32[10,10,32]{2,1,0:T(8,128)}', space=vmem, size = 0x14000, scoped, tag = 'scratch operand']
  #allocation4 [shape = 'f32[10,10,8]{2,1,0:T(8,128)}', space=vmem, size = 0x14000, scoped, tag = 'scratch operand']
  %s0 = inlined_call_operand.vmem [shape: f32[2,8,8,4], index: 0, kind: input, shape index: {}]
  %s1 = inlined_call_operand.vmem [shape: f32[2,4,8,8,32], index: 1, kind: input, shape index: {}, may-alias: {1,12}]
  %s2 = inlined_call_operand.vmem [shape: bf16[36,8], index: 2, kind: input, shape index: {}]
  %s3 = inlined_call_operand.vmem [shape: bf16[288,8], index: 3, kind: input, shape index: {}]
  %s4 = inlined_call_operand.vmem [shape: f32[1,8], index: 4, kind: input, shape index: {}]
  %s5 = inlined_call_operand.vmem [shape: f32[1,8], index: 5, kind: input, shape index: {}]
  %s6 = inlined_call_operand.vmem [shape: bf16[72,8], index: 6, kind: input, shape index: {}]
  %s7 = inlined_call_operand.vmem [shape: f32[1,8], index: 7, kind: input, shape index: {}]
  %s8 = inlined_call_operand.vmem [shape: f32[1,8], index: 8, kind: input, shape index: {}]
  %s9 = inlined_call_operand.vmem [shape: f32[8,32], index: 9, kind: input, shape index: {}]
  %s10 = inlined_call_operand.vmem [shape: f32[1,32], index: 10, kind: input, shape index: {}]
  %s11 = inlined_call_operand.vmem [shape: f32[2,8,8,8], index: 11, kind: output, shape index: {0}]
  %s12 = inlined_call_operand.vmem [shape: f32[2,4,8,8,32], index: 12, kind: output, shape index: {1}, may-alias: {1,12}]
  %13 = xla_tuple %s11, %s12
  %s14 = sld [smem:[#allocation0]]
  $region85: #{frru_forward.1} parent=0
    _
  %s16 = ssub.s32 1, %s14
  %s17 = scalar_select 0, %s16, %s14
  loop: start=0, step=1, limit=4
  $region2: #{frru_forward.1} parent=0 // loop_pre_header
    _
  $region3: #{frru_forward.1} parent=0 // loop_header
    %s19 = sphi 0, %s23
    %p20 = scmp.ge.s32.totalorder %s19, 4
    %s29 = sphi 0, %s31
    %s32 = sphi 0, %s29
    %s33 = sphi 0, %s32
    %s49 = sphi 0, %s33
    %s55 = sphi 0, %s57
    %s58 = sphi 0, %s55
    %s59 = sphi 0, %s58
    %s75 = sphi 0, %s59
    %s79 = sphi 0, %s79
    %s81 = sphi 0, %s79
    %s82 = sphi 0, %s81
    %s96 = sphi 0, %s82
    %s100 = sphi 0, %s100
    %s102 = sphi 0, %s100
    %s103 = sphi 0, %s102
    %s117 = sphi 0, %s103
    %s121 = sphi 0, %s121
    %s123 = sphi 0, %s121
    %s124 = sphi 0, %s123
    %s138 = sphi 0, %s124
    %s142 = sphi 0, %s142
    %s144 = sphi 0, %s142
    %s145 = sphi 0, %s144
    %s159 = sphi 0, %s145
    %s163 = sphi 0, %s163
    %s165 = sphi 0, %s163
    %s166 = sphi 0, %s165
    %s180 = sphi 0, %s166
    %s184 = sphi 0, %s184
    %s186 = sphi 0, %s184
    %s187 = sphi 0, %s186
    %s201 = sphi 0, %s187
    %s205 = sphi 0, %s205
    %s207 = sphi 0, %s205
    %s208 = sphi 0, %s207
    %s222 = sphi 0, %s208
    %s226 = sphi 0, %s226
    %s228 = sphi 0, %s226
    %s229 = sphi 0, %s228
    %s243 = sphi 0, %s229
    %s247 = sphi 0, %s247
    %s249 = sphi 0, %s247
    %s250 = sphi 0, %s249
    %s264 = sphi 0, %s250
    %s270 = sphi 0, %s272
    %s273 = sphi 0, %s270
    %s274 = sphi 0, %s273
    %s290 = sphi 0, %s274
    %s296 = sphi 0, %s298
    %s299 = sphi 0, %s296
    %s300 = sphi 0, %s299
    %s316 = sphi 0, %s300
  $region4: #{frru_forward.1} parent=0 // loop_header_branch
    %22 = sbr.rel (%p20) target = $region8
  $region5: #{frru_forward.1} parent=0 // loop_body
    %s24 = ssub.s32 %s19, 1
    %s25 = ssub.s32 %s19, 2
    %s26 = sadd.s32 %s19, 1
    %s27 = ssub.s32 %s19, %s26
    %p28 = scmp.eq.s32.totalorder %s27, 0
    %s30 = sadd.s32 %s29, 1
    %s31 = scalar_select %p28, %s29, %s30
    %p34 = pneg %p28
    %p35 = scmp.eq.s32.totalorder %s19, 1
    %p36 = por %p34, %p35
    %p37 = scmp.ne.s32.totalorder %s29, %s32
    %p38 = scmp.eq.s32.totalorder %s19, 0
    %p39 = por %p37, %p38
    %p40 = scmp.ne.s32.totalorder %s29, %s32
    %p41 = scmp.eq.s32.totalorder %s24, 1
    %p42 = por %p40, %p41
    %p43 = scmp.ne.s32.totalorder %s32, %s33
    %p44 = scmp.eq.s32.totalorder %s24, 0
    %p45 = por %p43, %p44
    %p46 = scmp.ne.s32.totalorder %s32, %s33
    %p47 = scmp.eq.s32.totalorder %s25, 1
    %p48 = por %p46, %p47
    %p50 = scmp.ne.s32.totalorder %s33, %s49
    %p51 = scmp.eq.s32.totalorder %s25, 0
    %p52 = por %p50, %p51
    %s53 = ssub.s32 %s19, %s26
    %p54 = scmp.eq.s32.totalorder %s53, 0
    %s56 = sadd.s32 %s55, 1
    %s57 = scalar_select %p54, %s55, %s56
    %p60 = pneg %p54
    %p61 = scmp.eq.s32.totalorder %s19, 1
    %p62 = por %p60, %p61
    %p63 = scmp.ne.s32.totalorder %s55, %s58
    %p64 = scmp.eq.s32.totalorder %s19, 0
    %p65 = por %p63, %p64
    %p66 = scmp.ne.s32.totalorder %s55, %s58
    %p67 = scmp.eq.s32.totalorder %s24, 1
    %p68 = por %p66, %p67
    %p69 = scmp.ne.s32.totalorder %s58, %s59
    %p70 = scmp.eq.s32.totalorder %s24, 0
    %p71 = por %p69, %p70
    %p72 = scmp.ne.s32.totalorder %s58, %s59
    %p73 = scmp.eq.s32.totalorder %s25, 1
    %p74 = por %p72, %p73
    %p76 = scmp.ne.s32.totalorder %s59, %s75
    %p77 = scmp.eq.s32.totalorder %s25, 0
    %p78 = por %p76, %p77
    %s80 = sadd.s32 %s79, 1
    %p83 = scmp.eq.s32.totalorder %s19, 1
    %p84 = scmp.ne.s32.totalorder %s79, %s81
    %p85 = scmp.eq.s32.totalorder %s19, 0
    %p86 = por %p84, %p85
    %p87 = scmp.ne.s32.totalorder %s79, %s81
    %p88 = scmp.eq.s32.totalorder %s24, 1
    %p89 = por %p87, %p88
    %p90 = scmp.ne.s32.totalorder %s81, %s82
    %p91 = scmp.eq.s32.totalorder %s24, 0
    %p92 = por %p90, %p91
    %p93 = scmp.ne.s32.totalorder %s81, %s82
    %p94 = scmp.eq.s32.totalorder %s25, 1
    %p95 = por %p93, %p94
    %p97 = scmp.ne.s32.totalorder %s82, %s96
    %p98 = scmp.eq.s32.totalorder %s25, 0
    %p99 = por %p97, %p98
    %s101 = sadd.s32 %s100, 1
    %p104 = scmp.eq.s32.totalorder %s19, 1
    %p105 = scmp.ne.s32.totalorder %s100, %s102
    %p106 = scmp.eq.s32.totalorder %s19, 0
    %p107 = por %p105, %p106
    %p108 = scmp.ne.s32.totalorder %s100, %s102
    %p109 = scmp.eq.s32.totalorder %s24, 1
    %p110 = por %p108, %p109
    %p111 = scmp.ne.s32.totalorder %s102, %s103
    %p112 = scmp.eq.s32.totalorder %s24, 0
    %p113 = por %p111, %p112
    %p114 = scmp.ne.s32.totalorder %s102, %s103
    %p115 = scmp.eq.s32.totalorder %s25, 1
    %p116 = por %p114, %p115
    %p118 = scmp.ne.s32.totalorder %s103, %s117
    %p119 = scmp.eq.s32.totalorder %s25, 0
    %p120 = por %p118, %p119
    %s122 = sadd.s32 %s121, 1
    %p125 = scmp.eq.s32.totalorder %s19, 1
    %p126 = scmp.ne.s32.totalorder %s121, %s123
    %p127 = scmp.eq.s32.totalorder %s19, 0
    %p128 = por %p126, %p127
    %p129 = scmp.ne.s32.totalorder %s121, %s123
    %p130 = scmp.eq.s32.totalorder %s24, 1
    %p131 = por %p129, %p130
    %p132 = scmp.ne.s32.totalorder %s123, %s124
    %p133 = scmp.eq.s32.totalorder %s24, 0
    %p134 = por %p132, %p133
    %p135 = scmp.ne.s32.totalorder %s123, %s124
    %p136 = scmp.eq.s32.totalorder %s25, 1
    %p137 = por %p135, %p136
    %p139 = scmp.ne.s32.totalorder %s124, %s138
    %p140 = scmp.eq.s32.totalorder %s25, 0
    %p141 = por %p139, %p140
    %s143 = sadd.s32 %s142, 1
    %p146 = scmp.eq.s32.totalorder %s19, 1
    %p147 = scmp.ne.s32.totalorder %s142, %s144
    %p148 = scmp.eq.s32.totalorder %s19, 0
    %p149 = por %p147, %p148
    %p150 = scmp.ne.s32.totalorder %s142, %s144
    %p151 = scmp.eq.s32.totalorder %s24, 1
    %p152 = por %p150, %p151
    %p153 = scmp.ne.s32.totalorder %s144, %s145
    %p154 = scmp.eq.s32.totalorder %s24, 0
    %p155 = por %p153, %p154
    %p156 = scmp.ne.s32.totalorder %s144, %s145
    %p157 = scmp.eq.s32.totalorder %s25, 1
    %p158 = por %p156, %p157
    %p160 = scmp.ne.s32.totalorder %s145, %s159
    %p161 = scmp.eq.s32.totalorder %s25, 0
    %p162 = por %p160, %p161
    %s164 = sadd.s32 %s163, 1
    %p167 = scmp.eq.s32.totalorder %s19, 1
    %p168 = scmp.ne.s32.totalorder %s163, %s165
    %p169 = scmp.eq.s32.totalorder %s19, 0
    %p170 = por %p168, %p169
    %p171 = scmp.ne.s32.totalorder %s163, %s165
    %p172 = scmp.eq.s32.totalorder %s24, 1
    %p173 = por %p171, %p172
    %p174 = scmp.ne.s32.totalorder %s165, %s166
    %p175 = scmp.eq.s32.totalorder %s24, 0
    %p176 = por %p174, %p175
    %p177 = scmp.ne.s32.totalorder %s165, %s166
    %p178 = scmp.eq.s32.totalorder %s25, 1
    %p179 = por %p177, %p178
    %p181 = scmp.ne.s32.totalorder %s166, %s180
    %p182 = scmp.eq.s32.totalorder %s25, 0
    %p183 = por %p181, %p182
    %s185 = sadd.s32 %s184, 1
    %p188 = scmp.eq.s32.totalorder %s19, 1
    %p189 = scmp.ne.s32.totalorder %s184, %s186
    %p190 = scmp.eq.s32.totalorder %s19, 0
    %p191 = por %p189, %p190
    %p192 = scmp.ne.s32.totalorder %s184, %s186
    %p193 = scmp.eq.s32.totalorder %s24, 1
    %p194 = por %p192, %p193
    %p195 = scmp.ne.s32.totalorder %s186, %s187
    %p196 = scmp.eq.s32.totalorder %s24, 0
    %p197 = por %p195, %p196
    %p198 = scmp.ne.s32.totalorder %s186, %s187
    %p199 = scmp.eq.s32.totalorder %s25, 1
    %p200 = por %p198, %p199
    %p202 = scmp.ne.s32.totalorder %s187, %s201
    %p203 = scmp.eq.s32.totalorder %s25, 0
    %p204 = por %p202, %p203
    %s206 = sadd.s32 %s205, 1
    %p209 = scmp.eq.s32.totalorder %s19, 1
    %p210 = scmp.ne.s32.totalorder %s205, %s207
    %p211 = scmp.eq.s32.totalorder %s19, 0
    %p212 = por %p210, %p211
    %p213 = scmp.ne.s32.totalorder %s205, %s207
    %p214 = scmp.eq.s32.totalorder %s24, 1
    %p215 = por %p213, %p214
    %p216 = scmp.ne.s32.totalorder %s207, %s208
    %p217 = scmp.eq.s32.totalorder %s24, 0
    %p218 = por %p216, %p217
    %p219 = scmp.ne.s32.totalorder %s207, %s208
    %p220 = scmp.eq.s32.totalorder %s25, 1
    %p221 = por %p219, %p220
    %p223 = scmp.ne.s32.totalorder %s208, %s222
    %p224 = scmp.eq.s32.totalorder %s25, 0
    %p225 = por %p223, %p224
    %s227 = sadd.s32 %s226, 1
    %p230 = scmp.eq.s32.totalorder %s19, 1
    %p231 = scmp.ne.s32.totalorder %s226, %s228
    %p232 = scmp.eq.s32.totalorder %s19, 0
    %p233 = por %p231, %p232
    %p234 = scmp.ne.s32.totalorder %s226, %s228
    %p235 = scmp.eq.s32.totalorder %s24, 1
    %p236 = por %p234, %p235
    %p237 = scmp.ne.s32.totalorder %s228, %s229
    %p238 = scmp.eq.s32.totalorder %s24, 0
    %p239 = por %p237, %p238
    %p240 = scmp.ne.s32.totalorder %s228, %s229
    %p241 = scmp.eq.s32.totalorder %s25, 1
    %p242 = por %p240, %p241
    %p244 = scmp.ne.s32.totalorder %s229, %s243
    %p245 = scmp.eq.s32.totalorder %s25, 0
    %p246 = por %p244, %p245
    %s248 = sadd.s32 %s247, 1
    %p251 = scmp.eq.s32.totalorder %s19, 1
    %p252 = scmp.ne.s32.totalorder %s247, %s249
    %p253 = scmp.eq.s32.totalorder %s19, 0
    %p254 = por %p252, %p253
    %p255 = scmp.ne.s32.totalorder %s247, %s249
    %p256 = scmp.eq.s32.totalorder %s24, 1
    %p257 = por %p255, %p256
    %p258 = scmp.ne.s32.totalorder %s249, %s250
    %p259 = scmp.eq.s32.totalorder %s24, 0
    %p260 = por %p258, %p259
    %p261 = scmp.ne.s32.totalorder %s249, %s250
    %p262 = scmp.eq.s32.totalorder %s25, 1
    %p263 = por %p261, %p262
    %p265 = scmp.ne.s32.totalorder %s250, %s264
    %p266 = scmp.eq.s32.totalorder %s25, 0
    %p267 = por %p265, %p266
    %s268 = ssub.s32 %s19, %s26
    %p269 = scmp.eq.s32.totalorder %s268, 0
    %s271 = sadd.s32 %s270, 1
    %s272 = scalar_select %p269, %s270, %s271
    %p275 = pneg %p269
    %p276 = scmp.eq.s32.totalorder %s19, 1
    %p277 = por %p275, %p276
    %p278 = scmp.ne.s32.totalorder %s270, %s273
    %p279 = scmp.eq.s32.totalorder %s19, 0
    %p280 = por %p278, %p279
    %p281 = scmp.ne.s32.totalorder %s270, %s273
    %p282 = scmp.eq.s32.totalorder %s24, 1
    %p283 = por %p281, %p282
    %p284 = scmp.ne.s32.totalorder %s273, %s274
    %p285 = scmp.eq.s32.totalorder %s24, 0
    %p286 = por %p284, %p285
    %p287 = scmp.ne.s32.totalorder %s273, %s274
    %p288 = scmp.eq.s32.totalorder %s25, 1
    %p289 = por %p287, %p288
    %p291 = scmp.ne.s32.totalorder %s274, %s290
    %p292 = scmp.eq.s32.totalorder %s25, 0
    %p293 = por %p291, %p292
    %s294 = ssub.s32 %s19, %s26
    %p295 = scmp.eq.s32.totalorder %s294, 0
    %s297 = sadd.s32 %s296, 1
    %s298 = scalar_select %p295, %s296, %s297
    %p301 = pneg %p295
    %p302 = scmp.eq.s32.totalorder %s19, 1
    %p303 = por %p301, %p302
    %p304 = scmp.ne.s32.totalorder %s296, %s299
    %p305 = scmp.eq.s32.totalorder %s19, 0
    %p306 = por %p304, %p305
    %p307 = scmp.ne.s32.totalorder %s296, %s299
    %p308 = scmp.eq.s32.totalorder %s24, 1
    %p309 = por %p307, %p308
    %p310 = scmp.ne.s32.totalorder %s299, %s300
    %p311 = scmp.eq.s32.totalorder %s24, 0
    %p312 = por %p310, %p311
    %p313 = scmp.ne.s32.totalorder %s299, %s300
    %p314 = scmp.eq.s32.totalorder %s25, 1
    %p315 = por %p313, %p314
    %p317 = scmp.ne.s32.totalorder %s300, %s316
    %p318 = scmp.eq.s32.totalorder %s25, 0
    %p319 = por %p317, %p318
    %p320 = scmp.le.s32.totalorder 1, %s19
    %p321 = scmp.lt.s32.totalorder %s19, 3
    %p322 = pnand %p320, %p321
    %p323 = pneg %p322
    // Predicated region
    $region9: #{frru_forward.1} parent=5 // pred_check
      _
    $region10: #{frru_forward.1} parent=5 // pred_check_branch
      %325 = sbr.rel (%p322) target = $region12
    $region11: #{frru_forward.1} parent=5 // pred_region
      %s326 = ssub.s32 %s19, 1
      // Predicated region
      $region13: #{frru_forward.1} parent=11 // pred_check
        %p327 = pneg %p92
      $region14: #{frru_forward.1} parent=11 // pred_check_branch
        %329 = sbr.rel (%p327) target = $region16
      $region15: #{frru_forward.1} parent=11 // pred_region
        _
      $region16: #{frru_forward.1} parent=11 // pred_fallthru
        _
      // Predicated region
      $region17: #{frru_forward.1} parent=11 // pred_check
        %p330 = pneg %p113
      $region18: #{frru_forward.1} parent=11 // pred_check_branch
        %332 = sbr.rel (%p330) target = $region20
      $region19: #{frru_forward.1} parent=11 // pred_region
        _
      $region20: #{frru_forward.1} parent=11 // pred_fallthru
        _
      // Predicated region
      $region21: #{frru_forward.1} parent=11 // pred_check
        %p333 = pneg %p134
      $region22: #{frru_forward.1} parent=11 // pred_check_branch
        %335 = sbr.rel (%p333) target = $region24
      $region23: #{frru_forward.1} parent=11 // pred_region
        _
      $region24: #{frru_forward.1} parent=11 // pred_fallthru
        _
      // Predicated region
      $region25: #{frru_forward.1} parent=11 // pred_check
        %p336 = pneg %p155
      $region26: #{frru_forward.1} parent=11 // pred_check_branch
        %338 = sbr.rel (%p336) target = $region28
      $region27: #{frru_forward.1} parent=11 // pred_region
        _
      $region28: #{frru_forward.1} parent=11 // pred_fallthru
        _
      // Predicated region
      $region29: #{frru_forward.1} parent=11 // pred_check
        %p339 = pneg %p176
      $region30: #{frru_forward.1} parent=11 // pred_check_branch
        %341 = sbr.rel (%p339) target = $region32
      $region31: #{frru_forward.1} parent=11 // pred_region
        _
      $region32: #{frru_forward.1} parent=11 // pred_fallthru
        _
      // Predicated region
      $region33: #{frru_forward.1} parent=11 // pred_check
        %p342 = pneg %p197
      $region34: #{frru_forward.1} parent=11 // pred_check_branch
        %344 = sbr.rel (%p342) target = $region36
      $region35: #{frru_forward.1} parent=11 // pred_region
        _
      $region36: #{frru_forward.1} parent=11 // pred_fallthru
        _
      // Predicated region
      $region37: #{frru_forward.1} parent=11 // pred_check
        %p345 = pneg %p218
      $region38: #{frru_forward.1} parent=11 // pred_check_branch
        %347 = sbr.rel (%p345) target = $region40
      $region39: #{frru_forward.1} parent=11 // pred_region
        _
      $region40: #{frru_forward.1} parent=11 // pred_fallthru
        _
      // Predicated region
      $region41: #{frru_forward.1} parent=11 // pred_check
        %p348 = pneg %p239
      $region42: #{frru_forward.1} parent=11 // pred_check_branch
        %350 = sbr.rel (%p348) target = $region44
      $region43: #{frru_forward.1} parent=11 // pred_region
        _
      $region44: #{frru_forward.1} parent=11 // pred_fallthru
        _
      // Predicated region
      $region45: #{frru_forward.1} parent=11 // pred_check
        %p351 = pneg %p260
      $region46: #{frru_forward.1} parent=11 // pred_check_branch
        %353 = sbr.rel (%p351) target = $region48
      $region47: #{frru_forward.1} parent=11 // pred_region
        _
      $region48: #{frru_forward.1} parent=11 // pred_fallthru
        _
    $region12: #{frru_forward.1} parent=5 // pred_fallthru
      _
    %p354 = scmp.lt.s32.totalorder %s19, 2
    // Predicated region
    $region49: #{frru_forward.1} parent=5 // pred_check
      %p355 = pneg %p354
    $region50: #{frru_forward.1} parent=5 // pred_check_branch
      %357 = sbr.rel (%p355) target = $region52
    $region51: #{frru_forward.1} parent=5 // pred_region
      // Predicated region
      $region53: #{frru_forward.1} parent=51 // pred_check
        %p358 = pneg %p39
      $region54: #{frru_forward.1} parent=51 // pred_check_branch
        %360 = sbr.rel (%p358) target = $region56
      $region55: #{frru_forward.1} parent=51 // pred_region
        %p361 = scmp.lt.s32.totalorder %s19, 1
        %s362 = scalar_select %p361, %s19, 1
        %s363 = smul.addr %s362, 8
        %s364 = smul.addr %s363, 8
        %s365 = scalar_lea.vmem %s0, %s364
      $region56: #{frru_forward.1} parent=51 // pred_fallthru
        _
      // Predicated region
      $region57: #{frru_forward.1} parent=51 // pred_check
        %p366 = pneg %p65
      $region58: #{frru_forward.1} parent=51 // pred_check_branch
        %368 = sbr.rel (%p366) target = $region60
      $region59: #{frru_forward.1} parent=51 // pred_region
        %p369 = scmp.lt.s32.totalorder %s19, 1
        %s370 = scalar_select %p369, %s19, 1
        %s371 = smul.addr %s370, 32
        %s372 = smul.addr %s371, 8
        %s373 = scalar_lea.vmem %s1, %s372
      $region60: #{frru_forward.1} parent=51 // pred_fallthru
        _
    $region52: #{frru_forward.1} parent=5 // pred_fallthru
      _
    %p374 = scmp.le.s32.totalorder 1, %s19
    %p375 = scmp.lt.s32.totalorder %s19, 3
    %p376 = pnand %p374, %p375
    %p377 = pneg %p376
    // Predicated region
    $region61: #{frru_forward.1} parent=5 // pred_check
      _
    $region62: #{frru_forward.1} parent=5 // pred_check_branch
      %379 = sbr.rel (%p376) target = $region64
    $region63: #{frru_forward.1} parent=5 // pred_region
      %s380 = ssub.s32 %s19, 1
      %p381 = scmp.lt.s32.totalorder %s24, 1
      %s382 = scalar_select %p381, %s24, 1
      %s383 = smul.addr %s382, 8
      %s384 = smul.addr %s383, 8
      %s385 = scalar_lea.vmem %s0, %s384
      %p386 = pneg %p45
      %p387 = pneg %p42
      %p388 = scmp.lt.s32.totalorder %s24, 1
      %s389 = scalar_select %p388, %s24, 1
      %s390 = smul.addr %s389, 32
      %s391 = smul.addr %s390, 8
      %s392 = scalar_lea.vmem %s1, %s391
      %p393 = pneg %p71
      %p394 = pneg %p68
      %p395 = pneg %p92
      %p396 = pneg %p89
      %p397 = pneg %p113
      %p398 = pneg %p110
      %p399 = pneg %p134
      %p400 = pneg %p131
      %p401 = pneg %p155
      %p402 = pneg %p152
      %p403 = pneg %p176
      %p404 = pneg %p173
      %p405 = pneg %p197
      %p406 = pneg %p194
      %p407 = pneg %p218
      %p408 = pneg %p215
      %p409 = pneg %p239
      %p410 = pneg %p236
      %p411 = pneg %p260
      %p412 = pneg %p257
      %p413 = pneg %p286
      %p414 = pneg %p283
      %p415 = scmp.lt.s32.totalorder %s24, 1
      %s416 = scalar_select %p415, %s24, 1
      %s417 = smul.addr %s416, 8
      %s418 = smul.addr %s417, 8
      %s419 = scalar_lea.vmem %s11, %s418
      %p420 = pneg %p312
      %p421 = pneg %p309
      %p422 = scmp.lt.s32.totalorder %s24, 1
      %s423 = scalar_select %p422, %s24, 1
      %s424 = smul.addr %s423, 32
      %s425 = smul.addr %s424, 8
      %s426 = scalar_lea.vmem %s12, %s425
      %p427 = scmp.lt.s32.totalorder %s24, 1
      %s428 = scalar_select %p427, %s24, 1
      %s429 = smul.addr %s428, 8
      %s430 = smul.addr %s429, 8
      %s431 = scalar_lea.vmem %s0, %s430
      %p432 = scmp.lt.s32.totalorder %s24, 1
      %s433 = scalar_select %p432, %s24, 1
      %s434 = smul.addr %s433, 32
      %s435 = smul.addr %s434, 8
      %s436 = scalar_lea.vmem %s1, %s435
      %p437 = scmp.lt.s32.totalorder %s24, 1
      %s438 = scalar_select %p437, %s24, 1
      %s439 = smul.addr %s438, 8
      %s440 = smul.addr %s439, 8
      %s441 = scalar_lea.vmem %s11, %s440
      %p442 = scmp.lt.s32.totalorder %s24, 1
      %s443 = scalar_select %p442, %s24, 1
      %s444 = smul.addr %s443, 32
      %s445 = smul.addr %s444, 8
      %s446 = scalar_lea.vmem %s12, %s445
      %v448 = vld [vmem:[%s436] sm:$0xff]
      %v449 = vld [vmem:[%s436 + $0x8] sm:$0xff]
      %v450 = vld [vmem:[%s436 + $0x10] sm:$0xff]
      %v451 = vld [vmem:[%s436 + $0x18] sm:$0xff]
      %v452 = vld [vmem:[%s436 + $0x20] sm:$0xff]
      %v453 = vld [vmem:[%s436 + $0x28] sm:$0xff]
      %v454 = vld [vmem:[%s436 + $0x30] sm:$0xff]
      %v455 = vld [vmem:[%s436 + $0x38] sm:$0xff]
      %v456 = vld [vmem:[%s436 + $0x40] sm:$0xff]
      %v457 = vld [vmem:[%s436 + $0x48] sm:$0xff]
      %v458 = vld [vmem:[%s436 + $0x50] sm:$0xff]
      %v459 = vld [vmem:[%s436 + $0x58] sm:$0xff]
      %v460 = vld [vmem:[%s436 + $0x60] sm:$0xff]
      %v461 = vld [vmem:[%s436 + $0x68] sm:$0xff]
      %v462 = vld [vmem:[%s436 + $0x70] sm:$0xff]
      %v463 = vld [vmem:[%s436 + $0x78] sm:$0xff]
      %v464 = vld [vmem:[%s436 + $0x80] sm:$0xff]
      %v465 = vld [vmem:[%s436 + $0x88] sm:$0xff]
      %v466 = vld [vmem:[%s436 + $0x90] sm:$0xff]
      %v467 = vld [vmem:[%s436 + $0x98] sm:$0xff]
      %v468 = vld [vmem:[%s436 + $0xa0] sm:$0xff]
      %v469 = vld [vmem:[%s436 + $0xa8] sm:$0xff]
      %v470 = vld [vmem:[%s436 + $0xb0] sm:$0xff]
      %v471 = vld [vmem:[%s436 + $0xb8] sm:$0xff]
      %v472 = vld [vmem:[%s436 + $0xc0] sm:$0xff]
      %v473 = vld [vmem:[%s436 + $0xc8] sm:$0xff]
      %v474 = vld [vmem:[%s436 + $0xd0] sm:$0xff]
      %v475 = vld [vmem:[%s436 + $0xd8] sm:$0xff]
      %v476 = vld [vmem:[%s436 + $0xe0] sm:$0xff]
      %v477 = vld [vmem:[%s436 + $0xe8] sm:$0xff]
      %v478 = vld [vmem:[%s436 + $0xf0] sm:$0xff]
      %v479 = vld [vmem:[%s436 + $0xf8] sm:$0xff]
      %vm480 = vcmask 261120
      %v481 = vsel %vm480, %v448, -inf
      %v482 = vsel %vm480, %v456, -inf
      %v483 = vmax.f32 %v481, %v482
      %v484 = vsel %vm480, %v464, -inf
      %v485 = vmax.f32 %v483, %v484
      %v486 = vsel %vm480, %v472, -inf
      %v487 = vmax.f32 %v485, %v486
      %v488 = vsel %vm480, %v449, -inf
      %v489 = vsel %vm480, %v457, -inf
      %v490 = vmax.f32 %v488, %v489
      %v491 = vsel %vm480, %v465, -inf
      %v492 = vmax.f32 %v490, %v491
      %v493 = vsel %vm480, %v473, -inf
      %v494 = vmax.f32 %v492, %v493
      %v495 = vsel %vm480, %v450, -inf
      %v496 = vsel %vm480, %v458, -inf
      %v497 = vmax.f32 %v495, %v496
      %v498 = vsel %vm480, %v466, -inf
      %v499 = vmax.f32 %v497, %v498
      %v500 = vsel %vm480, %v474, -inf
      %v501 = vmax.f32 %v499, %v500
      %v502 = vsel %vm480, %v451, -inf
      %v503 = vsel %vm480, %v459, -inf
      %v504 = vmax.f32 %v502, %v503
      %v505 = vsel %vm480, %v467, -inf
      %v506 = vmax.f32 %v504, %v505
      %v507 = vsel %vm480, %v475, -inf
      %v508 = vmax.f32 %v506, %v507
      %v509 = vsel %vm480, %v452, -inf
      %v510 = vsel %vm480, %v460, -inf
      %v511 = vmax.f32 %v509, %v510
      %v512 = vsel %vm480, %v468, -inf
      %v513 = vmax.f32 %v511, %v512
      %v514 = vsel %vm480, %v476, -inf
      %v515 = vmax.f32 %v513, %v514
      %v516 = vsel %vm480, %v453, -inf
      %v517 = vsel %vm480, %v461, -inf
      %v518 = vmax.f32 %v516, %v517
      %v519 = vsel %vm480, %v469, -inf
      %v520 = vmax.f32 %v518, %v519
      %v521 = vsel %vm480, %v477, -inf
      %v522 = vmax.f32 %v520, %v521
      %v523 = vsel %vm480, %v454, -inf
      %v524 = vsel %vm480, %v462, -inf
      %v525 = vmax.f32 %v523, %v524
      %v526 = vsel %vm480, %v470, -inf
      %v527 = vmax.f32 %v525, %v526
      %v528 = vsel %vm480, %v478, -inf
      %v529 = vmax.f32 %v527, %v528
      %v530 = vsel %vm480, %v455, -inf
      %v531 = vsel %vm480, %v463, -inf
      %v532 = vmax.f32 %v530, %v531
      %v533 = vsel %vm480, %v471, -inf
      %v534 = vmax.f32 %v532, %v533
      %v535 = vsel %vm480, %v479, -inf
      %v536 = vmax.f32 %v534, %v535
      %vm537 = vcmask 31744
      %538 = vst.msk [vmem:[#allocation2] sm:$0xff] %vm537, 0.0
      %vm539 = vcmask 25600
      %540 = vst.msk [vmem:[#allocation2 + $0x8] sm:$0x3] %vm539, 0.0
      %541 = vst.msk [vmem:[#allocation2 + $0x10] sm:$0xff] %vm537, 0.0
      %542 = vst.msk [vmem:[#allocation2 + $0x18] sm:$0x3] %vm539, 0.0
      %543 = vst.msk [vmem:[#allocation2 + $0x20] sm:$0xff] %vm537, 0.0
      %544 = vst.msk [vmem:[#allocation2 + $0x28] sm:$0x3] %vm539, 0.0
      %545 = vst.msk [vmem:[#allocation2 + $0x30] sm:$0xff] %vm537, 0.0
      %546 = vst.msk [vmem:[#allocation2 + $0x38] sm:$0x3] %vm539, 0.0
      %547 = vst.msk [vmem:[#allocation2 + $0x40] sm:$0xff] %vm537, 0.0
      %548 = vst.msk [vmem:[#allocation2 + $0x48] sm:$0x3] %vm539, 0.0
      %549 = vst.msk [vmem:[#allocation2 + $0x50] sm:$0xff] %vm537, 0.0
      %550 = vst.msk [vmem:[#allocation2 + $0x58] sm:$0x3] %vm539, 0.0
      %551 = vst.msk [vmem:[#allocation2 + $0x60] sm:$0xff] %vm537, 0.0
      %552 = vst.msk [vmem:[#allocation2 + $0x68] sm:$0x3] %vm539, 0.0
      %553 = vst.msk [vmem:[#allocation2 + $0x70] sm:$0xff] %vm537, 0.0
      %554 = vst.msk [vmem:[#allocation2 + $0x78] sm:$0x3] %vm539, 0.0
      %555 = vst.msk [vmem:[#allocation2 + $0x80] sm:$0xff] %vm537, 0.0
      %556 = vst.msk [vmem:[#allocation2 + $0x88] sm:$0x3] %vm539, 0.0
      %557 = vst.msk [vmem:[#allocation2 + $0x90] sm:$0xff] %vm537, 0.0
      %558 = vst.msk [vmem:[#allocation2 + $0x98] sm:$0x3] %vm539, 0.0
      %559 = vst.msk [vmem:[#allocation3] sm:$0xff] %vm480, 0.0
      %vm560 = vcmask 254976
      %561 = vst.msk [vmem:[#allocation3 + $0x8] sm:$0x3] %vm560, 0.0
      %562 = vst.msk [vmem:[#allocation3 + $0x10] sm:$0xff] %vm480, 0.0
      %563 = vst.msk [vmem:[#allocation3 + $0x18] sm:$0x3] %vm560, 0.0
      %564 = vst.msk [vmem:[#allocation3 + $0x20] sm:$0xff] %vm480, 0.0
      %565 = vst.msk [vmem:[#allocation3 + $0x28] sm:$0x3] %vm560, 0.0
      %566 = vst.msk [vmem:[#allocation3 + $0x30] sm:$0xff] %vm480, 0.0
      %567 = vst.msk [vmem:[#allocation3 + $0x38] sm:$0x3] %vm560, 0.0
      %568 = vst.msk [vmem:[#allocation3 + $0x40] sm:$0xff] %vm480, 0.0
      %569 = vst.msk [vmem:[#allocation3 + $0x48] sm:$0x3] %vm560, 0.0
      %570 = vst.msk [vmem:[#allocation3 + $0x50] sm:$0xff] %vm480, 0.0
      %571 = vst.msk [vmem:[#allocation3 + $0x58] sm:$0x3] %vm560, 0.0
      %572 = vst.msk [vmem:[#allocation3 + $0x60] sm:$0xff] %vm480, 0.0
      %573 = vst.msk [vmem:[#allocation3 + $0x68] sm:$0x3] %vm560, 0.0
      %574 = vst.msk [vmem:[#allocation3 + $0x70] sm:$0xff] %vm480, 0.0
      %575 = vst.msk [vmem:[#allocation3 + $0x78] sm:$0x3] %vm560, 0.0
      %576 = vst.msk [vmem:[#allocation3 + $0x80] sm:$0xff] %vm480, 0.0
      %577 = vst.msk [vmem:[#allocation3 + $0x88] sm:$0x3] %vm560, 0.0
      %578 = vst.msk [vmem:[#allocation3 + $0x90] sm:$0xff] %vm480, 0.0
      %579 = vst.msk [vmem:[#allocation3 + $0x98] sm:$0x3] %vm560, 0.0
      %vm580 = vcmask 64512
      %581 = vst.msk [vmem:[#allocation4] sm:$0xff] %vm580, 0.0
      %vm582 = vcmask 58368
      %583 = vst.msk [vmem:[#allocation4 + $0x8] sm:$0x3] %vm582, 0.0
      %584 = vst.msk [vmem:[#allocation4 + $0x10] sm:$0xff] %vm580, 0.0
      %585 = vst.msk [vmem:[#allocation4 + $0x18] sm:$0x3] %vm582, 0.0
      %586 = vst.msk [vmem:[#allocation4 + $0x20] sm:$0xff] %vm580, 0.0
      %587 = vst.msk [vmem:[#allocation4 + $0x28] sm:$0x3] %vm582, 0.0
      %588 = vst.msk [vmem:[#allocation4 + $0x30] sm:$0xff] %vm580, 0.0
      %589 = vst.msk [vmem:[#allocation4 + $0x38] sm:$0x3] %vm582, 0.0
      %590 = vst.msk [vmem:[#allocation4 + $0x40] sm:$0xff] %vm580, 0.0
      %591 = vst.msk [vmem:[#allocation4 + $0x48] sm:$0x3] %vm582, 0.0
      %592 = vst.msk [vmem:[#allocation4 + $0x50] sm:$0xff] %vm580, 0.0
      %593 = vst.msk [vmem:[#allocation4 + $0x58] sm:$0x3] %vm582, 0.0
      %594 = vst.msk [vmem:[#allocation4 + $0x60] sm:$0xff] %vm580, 0.0
      %595 = vst.msk [vmem:[#allocation4 + $0x68] sm:$0x3] %vm582, 0.0
      %596 = vst.msk [vmem:[#allocation4 + $0x70] sm:$0xff] %vm580, 0.0
      %597 = vst.msk [vmem:[#allocation4 + $0x78] sm:$0x3] %vm582, 0.0
      %598 = vst.msk [vmem:[#allocation4 + $0x80] sm:$0xff] %vm580, 0.0
      %599 = vst.msk [vmem:[#allocation4 + $0x88] sm:$0x3] %vm582, 0.0
      %600 = vst.msk [vmem:[#allocation4 + $0x90] sm:$0xff] %vm580, 0.0
      %601 = vst.msk [vmem:[#allocation4 + $0x98] sm:$0x3] %vm582, 0.0
      %v602 = vld [vmem:[%s431] sm:$0xff]
      %v603 = vld [vmem:[%s431 + $0x8] sm:$0xff]
      %v604 = vld [vmem:[%s431 + $0x10] sm:$0xff]
      %v605 = vld [vmem:[%s431 + $0x18] sm:$0xff]
      %v606 = vld [vmem:[%s431 + $0x20] sm:$0xff]
      %v607 = vld [vmem:[%s431 + $0x28] sm:$0xff]
      %v608 = vld [vmem:[%s431 + $0x30] sm:$0xff]
      %v609 = vld [vmem:[%s431 + $0x38] sm:$0xff]
      %s610 = scalar_lea.vmem [#allocation2], 16
      %611 = vst.msk [vmem:[%s610 + $0x1] sm:$0xff] %vm537, %v602
      %612 = vst.msk [vmem:[%s610 + $0x11] sm:$0xff] %vm537, %v603
      %613 = vst.msk [vmem:[%s610 + $0x21] sm:$0xff] %vm537, %v604
      %614 = vst.msk [vmem:[%s610 + $0x31] sm:$0xff] %vm537, %v605
      %615 = vst.msk [vmem:[%s610 + $0x41] sm:$0xff] %vm537, %v606
      %616 = vst.msk [vmem:[%s610 + $0x51] sm:$0xff] %vm537, %v607
      %617 = vst.msk [vmem:[%s610 + $0x61] sm:$0xff] %vm537, %v608
      %618 = vst.msk [vmem:[%s610 + $0x71] sm:$0xff] %vm537, %v609
      %s619 = scalar_lea.vmem [#allocation3], 16
      %620 = vst.msk [vmem:[%s619 + $0x1] sm:$0xff] %vm480, %v487
      %621 = vst.msk [vmem:[%s619 + $0x11] sm:$0xff] %vm480, %v494
      %622 = vst.msk [vmem:[%s619 + $0x21] sm:$0xff] %vm480, %v501
      %623 = vst.msk [vmem:[%s619 + $0x31] sm:$0xff] %vm480, %v508
      %624 = vst.msk [vmem:[%s619 + $0x41] sm:$0xff] %vm480, %v515
      %625 = vst.msk [vmem:[%s619 + $0x51] sm:$0xff] %vm480, %v522
      %626 = vst.msk [vmem:[%s619 + $0x61] sm:$0xff] %vm480, %v529
      %627 = vst.msk [vmem:[%s619 + $0x71] sm:$0xff] %vm480, %v536
      %v628 = vld [vmem:[#allocation2] sm:$0xff]
      %v629 = vld [vmem:[#allocation2 + $0x10] sm:$0xff]
      %v630 = vld [vmem:[#allocation2 + $0x20] sm:$0xff]
      %v631 = vld [vmem:[#allocation2 + $0x30] sm:$0xff]
      %v632 = vld [vmem:[#allocation2 + $0x40] sm:$0xff]
      %v633 = vld [vmem:[#allocation2 + $0x50] sm:$0xff]
      %v634 = vld [vmem:[#allocation2 + $0x60] sm:$0xff]
      %v635 = vld [vmem:[#allocation2 + $0x70] sm:$0xff]
      %v636 = vld [vmem:[#allocation2 + $0x1] sm:$0xff]
      %v637 = vld [vmem:[#allocation2 + $0x11] sm:$0xff]
      %v638 = vld [vmem:[#allocation2 + $0x21] sm:$0xff]
      %v639 = vld [vmem:[#allocation2 + $0x31] sm:$0xff]
      %v640 = vld [vmem:[#allocation2 + $0x41] sm:$0xff]
      %v641 = vld [vmem:[#allocation2 + $0x51] sm:$0xff]
      %v642 = vld [vmem:[#allocation2 + $0x61] sm:$0xff]
      %v643 = vld [vmem:[#allocation2 + $0x71] sm:$0xff]
      %v644 = vld [vmem:[#allocation2 + $0x2] sm:$0xff]
      %v645 = vld [vmem:[#allocation2 + $0x12] sm:$0xff]
      %v646 = vld [vmem:[#allocation2 + $0x22] sm:$0xff]
      %v647 = vld [vmem:[#allocation2 + $0x32] sm:$0xff]
      %v648 = vld [vmem:[#allocation2 + $0x42] sm:$0xff]
      %v649 = vld [vmem:[#allocation2 + $0x52] sm:$0xff]
      %v650 = vld [vmem:[#allocation2 + $0x62] sm:$0xff]
      %v651 = vld [vmem:[#allocation2 + $0x72] sm:$0xff]
      %v652 = vld [vmem:[%s610] sm:$0xff]
      %v653 = vld [vmem:[%s610 + $0x10] sm:$0xff]
      %v654 = vld [vmem:[%s610 + $0x20] sm:$0xff]
      %v655 = vld [vmem:[%s610 + $0x30] sm:$0xff]
      %v656 = vld [vmem:[%s610 + $0x40] sm:$0xff]
      %v657 = vld [vmem:[%s610 + $0x50] sm:$0xff]
      %v658 = vld [vmem:[%s610 + $0x60] sm:$0xff]
      %v659 = vld [vmem:[%s610 + $0x70] sm:$0xff]
      %v660 = vld [vmem:[%s610 + $0x1] sm:$0xff]
      %v661 = vld [vmem:[%s610 + $0x11] sm:$0xff]
      %v662 = vld [vmem:[%s610 + $0x21] sm:$0xff]
      %v663 = vld [vmem:[%s610 + $0x31] sm:$0xff]
      %v664 = vld [vmem:[%s610 + $0x41] sm:$0xff]
      %v665 = vld [vmem:[%s610 + $0x51] sm:$0xff]
      %v666 = vld [vmem:[%s610 + $0x61] sm:$0xff]
      %v667 = vld [vmem:[%s610 + $0x71] sm:$0xff]
      %v668 = vld [vmem:[%s610 + $0x2] sm:$0xff]
      %v669 = vld [vmem:[%s610 + $0x12] sm:$0xff]
      %v670 = vld [vmem:[%s610 + $0x22] sm:$0xff]
      %v671 = vld [vmem:[%s610 + $0x32] sm:$0xff]
      %v672 = vld [vmem:[%s610 + $0x42] sm:$0xff]
      %v673 = vld [vmem:[%s610 + $0x52] sm:$0xff]
      %v674 = vld [vmem:[%s610 + $0x62] sm:$0xff]
      %v675 = vld [vmem:[%s610 + $0x72] sm:$0xff]
      %s676 = scalar_lea.vmem [#allocation2], 32
      %v677 = vld [vmem:[%s676] sm:$0xff]
      %v678 = vld [vmem:[%s676 + $0x10] sm:$0xff]
      %v679 = vld [vmem:[%s676 + $0x20] sm:$0xff]
      %v680 = vld [vmem:[%s676 + $0x30] sm:$0xff]
      %v681 = vld [vmem:[%s676 + $0x40] sm:$0xff]
      %v682 = vld [vmem:[%s676 + $0x50] sm:$0xff]
      %v683 = vld [vmem:[%s676 + $0x60] sm:$0xff]
      %v684 = vld [vmem:[%s676 + $0x70] sm:$0xff]
      %v685 = vld [vmem:[%s676 + $0x1] sm:$0xff]
      %v686 = vld [vmem:[%s676 + $0x11] sm:$0xff]
      %v687 = vld [vmem:[%s676 + $0x21] sm:$0xff]
      %v688 = vld [vmem:[%s676 + $0x31] sm:$0xff]
      %v689 = vld [vmem:[%s676 + $0x41] sm:$0xff]
      %v690 = vld [vmem:[%s676 + $0x51] sm:$0xff]
      %v691 = vld [vmem:[%s676 + $0x61] sm:$0xff]
      %v692 = vld [vmem:[%s676 + $0x71] sm:$0xff]
      %v693 = vld [vmem:[%s676 + $0x2] sm:$0xff]
      %v694 = vld [vmem:[%s676 + $0x12] sm:$0xff]
      %v695 = vld [vmem:[%s676 + $0x22] sm:$0xff]
      %v696 = vld [vmem:[%s676 + $0x32] sm:$0xff]
      %v697 = vld [vmem:[%s676 + $0x42] sm:$0xff]
      %v698 = vld [vmem:[%s676 + $0x52] sm:$0xff]
      %v699 = vld [vmem:[%s676 + $0x62] sm:$0xff]
      %v700 = vld [vmem:[%s676 + $0x72] sm:$0xff]
      %709 = vrot.lane.b32.xlu0 %v636, 4
      %v710 = vpop.permute.xlu0 %709
      %711 = vrot.lane.b32.xlu0 %v637, 4
      %v712 = vpop.permute.xlu0 %711
      %713 = vrot.lane.b32.xlu0 %v638, 4
      %v714 = vpop.permute.xlu0 %713
      %715 = vrot.lane.b32.xlu0 %v639, 4
      %v716 = vpop.permute.xlu0 %715
      %717 = vrot.lane.b32.xlu0 %v640, 4
      %v718 = vpop.permute.xlu0 %717
      %719 = vrot.lane.b32.xlu0 %v641, 4
      %v720 = vpop.permute.xlu0 %719
      %721 = vrot.lane.b32.xlu0 %v642, 4
      %v722 = vpop.permute.xlu0 %721
      %723 = vrot.lane.b32.xlu0 %v643, 4
      %v724 = vpop.permute.xlu0 %723
      %741 = vrot.lane.b32.xlu0 %v644, 8
      %v742 = vpop.permute.xlu0 %741
      %743 = vrot.lane.b32.xlu0 %v645, 8
      %v744 = vpop.permute.xlu0 %743
      %745 = vrot.lane.b32.xlu0 %v646, 8
      %v746 = vpop.permute.xlu0 %745
      %747 = vrot.lane.b32.xlu0 %v647, 8
      %v748 = vpop.permute.xlu0 %747
      %749 = vrot.lane.b32.xlu0 %v648, 8
      %v750 = vpop.permute.xlu0 %749
      %751 = vrot.lane.b32.xlu0 %v649, 8
      %v752 = vpop.permute.xlu0 %751
      %753 = vrot.lane.b32.xlu0 %v650, 8
      %v754 = vpop.permute.xlu0 %753
      %755 = vrot.lane.b32.xlu0 %v651, 8
      %v756 = vpop.permute.xlu0 %755
      %773 = vrot.lane.b32.xlu0 %v652, 12
      %v774 = vpop.permute.xlu0 %773
      %775 = vrot.lane.b32.xlu0 %v653, 12
      %v776 = vpop.permute.xlu0 %775
      %777 = vrot.lane.b32.xlu0 %v654, 12
      %v778 = vpop.permute.xlu0 %777
      %779 = vrot.lane.b32.xlu0 %v655, 12
      %v780 = vpop.permute.xlu0 %779
      %781 = vrot.lane.b32.xlu0 %v656, 12
      %v782 = vpop.permute.xlu0 %781
      %783 = vrot.lane.b32.xlu0 %v657, 12
      %v784 = vpop.permute.xlu0 %783
      %785 = vrot.lane.b32.xlu0 %v658, 12
      %v786 = vpop.permute.xlu0 %785
      %787 = vrot.lane.b32.xlu0 %v659, 12
      %v788 = vpop.permute.xlu0 %787
      %805 = vrot.lane.b32.xlu0 %v660, 16
      %v806 = vpop.permute.xlu0 %805
      %807 = vrot.lane.b32.xlu0 %v661, 16
      %v808 = vpop.permute.xlu0 %807
      %809 = vrot.lane.b32.xlu0 %v662, 16
      %v810 = vpop.permute.xlu0 %809
      %811 = vrot.lane.b32.xlu0 %v663, 16
      %v812 = vpop.permute.xlu0 %811
      %813 = vrot.lane.b32.xlu0 %v664, 16
      %v814 = vpop.permute.xlu0 %813
      %815 = vrot.lane.b32.xlu0 %v665, 16
      %v816 = vpop.permute.xlu0 %815
      %817 = vrot.lane.b32.xlu0 %v666, 16
      %v818 = vpop.permute.xlu0 %817
      %819 = vrot.lane.b32.xlu0 %v667, 16
      %v820 = vpop.permute.xlu0 %819
      %837 = vrot.lane.b32.xlu0 %v668, 20
      %v838 = vpop.permute.xlu0 %837
      %839 = vrot.lane.b32.xlu0 %v669, 20
      %v840 = vpop.permute.xlu0 %839
      %841 = vrot.lane.b32.xlu0 %v670, 20
      %v842 = vpop.permute.xlu0 %841
      %843 = vrot.lane.b32.xlu0 %v671, 20
      %v844 = vpop.permute.xlu0 %843
      %845 = vrot.lane.b32.xlu0 %v672, 20
      %v846 = vpop.permute.xlu0 %845
      %847 = vrot.lane.b32.xlu0 %v673, 20
      %v848 = vpop.permute.xlu0 %847
      %849 = vrot.lane.b32.xlu0 %v674, 20
      %v850 = vpop.permute.xlu0 %849
      %851 = vrot.lane.b32.xlu0 %v675, 20
      %v852 = vpop.permute.xlu0 %851
      %869 = vrot.lane.b32.xlu0 %v677, 24
      %v870 = vpop.permute.xlu0 %869
      %871 = vrot.lane.b32.xlu0 %v678, 24
      %v872 = vpop.permute.xlu0 %871
      %873 = vrot.lane.b32.xlu0 %v679, 24
      %v874 = vpop.permute.xlu0 %873
      %875 = vrot.lane.b32.xlu0 %v680, 24
      %v876 = vpop.permute.xlu0 %875
      %877 = vrot.lane.b32.xlu0 %v681, 24
      %v878 = vpop.permute.xlu0 %877
      %879 = vrot.lane.b32.xlu0 %v682, 24
      %v880 = vpop.permute.xlu0 %879
      %881 = vrot.lane.b32.xlu0 %v683, 24
      %v882 = vpop.permute.xlu0 %881
      %883 = vrot.lane.b32.xlu0 %v684, 24
      %v884 = vpop.permute.xlu0 %883
      %901 = vrot.lane.b32.xlu0 %v685, 28
      %v902 = vpop.permute.xlu0 %901
      %903 = vrot.lane.b32.xlu0 %v686, 28
      %v904 = vpop.permute.xlu0 %903
      %905 = vrot.lane.b32.xlu0 %v687, 28
      %v906 = vpop.permute.xlu0 %905
      %907 = vrot.lane.b32.xlu0 %v688, 28
      %v908 = vpop.permute.xlu0 %907
      %909 = vrot.lane.b32.xlu0 %v689, 28
      %v910 = vpop.permute.xlu0 %909
      %911 = vrot.lane.b32.xlu0 %v690, 28
      %v912 = vpop.permute.xlu0 %911
      %913 = vrot.lane.b32.xlu0 %v691, 28
      %v914 = vpop.permute.xlu0 %913
      %915 = vrot.lane.b32.xlu0 %v692, 28
      %v916 = vpop.permute.xlu0 %915
      %933 = vrot.lane.b32.xlu0 %v693, 32
      %v934 = vpop.permute.xlu0 %933
      %935 = vrot.lane.b32.xlu0 %v694, 32
      %v936 = vpop.permute.xlu0 %935
      %937 = vrot.lane.b32.xlu0 %v695, 32
      %v938 = vpop.permute.xlu0 %937
      %939 = vrot.lane.b32.xlu0 %v696, 32
      %v940 = vpop.permute.xlu0 %939
      %941 = vrot.lane.b32.xlu0 %v697, 32
      %v942 = vpop.permute.xlu0 %941
      %943 = vrot.lane.b32.xlu0 %v698, 32
      %v944 = vpop.permute.xlu0 %943
      %945 = vrot.lane.b32.xlu0 %v699, 32
      %v946 = vpop.permute.xlu0 %945
      %947 = vrot.lane.b32.xlu0 %v700, 32
      %v948 = vpop.permute.xlu0 %947
      %v957 = vsel %vm537, %v628, %v710
      %v958 = vsel %vm537, %v629, %v712
      %v959 = vsel %vm537, %v630, %v714
      %v960 = vsel %vm537, %v631, %v716
      %v961 = vsel %vm537, %v632, %v718
      %v962 = vsel %vm537, %v633, %v720
      %v963 = vsel %vm537, %v634, %v722
      %v964 = vsel %vm537, %v635, %v724
      %v965 = vsel %vm580, %v957, %v742
      %v966 = vsel %vm580, %v958, %v744
      %v967 = vsel %vm580, %v959, %v746
      %v968 = vsel %vm580, %v960, %v748
      %v969 = vsel %vm580, %v961, %v750
      %v970 = vsel %vm580, %v962, %v752
      %v971 = vsel %vm580, %v963, %v754
      %v972 = vsel %vm580, %v964, %v756
      %vm973 = vcmask 97280
      %v974 = vsel %vm973, %v965, %v774
      %v975 = vsel %vm973, %v966, %v776
      %v976 = vsel %vm973, %v967, %v778
      %v977 = vsel %vm973, %v968, %v780
      %v978 = vsel %vm973, %v969, %v782
      %v979 = vsel %vm973, %v970, %v784
      %v980 = vsel %vm973, %v971, %v786
      %v981 = vsel %vm973, %v972, %v788
      %vm982 = vcmask 130048
      %v983 = vsel %vm982, %v974, %v806
      %v984 = vsel %vm982, %v975, %v808
      %v985 = vsel %vm982, %v976, %v810
      %v986 = vsel %vm982, %v977, %v812
      %v987 = vsel %vm982, %v978, %v814
      %v988 = vsel %vm982, %v979, %v816
      %v989 = vsel %vm982, %v980, %v818
      %v990 = vsel %vm982, %v981, %v820
      %vm991 = vcmask 162816
      %v992 = vsel %vm991, %v983, %v838
      %v993 = vsel %vm991, %v984, %v840
      %v994 = vsel %vm991, %v985, %v842
      %v995 = vsel %vm991, %v986, %v844
      %v996 = vsel %vm991, %v987, %v846
      %v997 = vsel %vm991, %v988, %v848
      %v998 = vsel %vm991, %v989, %v850
      %v999 = vsel %vm991, %v990, %v852
      %vm1000 = vcmask 195584
      %v1001 = vsel %vm1000, %v992, %v870
      %v1002 = vsel %vm1000, %v993, %v872
      %v1003 = vsel %vm1000, %v994, %v874
      %v1004 = vsel %vm1000, %v995, %v876
      %v1005 = vsel %vm1000, %v996, %v878
      %v1006 = vsel %vm1000, %v997, %v880
      %v1007 = vsel %vm1000, %v998, %v882
      %v1008 = vsel %vm1000, %v999, %v884
      %vm1009 = vcmask 228352
      %v1010 = vsel %vm1009, %v1001, %v902
      %v1011 = vsel %vm1009, %v1002, %v904
      %v1012 = vsel %vm1009, %v1003, %v906
      %v1013 = vsel %vm1009, %v1004, %v908
      %v1014 = vsel %vm1009, %v1005, %v910
      %v1015 = vsel %vm1009, %v1006, %v912
      %v1016 = vsel %vm1009, %v1007, %v914
      %v1017 = vsel %vm1009, %v1008, %v916
      %v1018 = vsel %vm480, %v1010, %v934
      %v1019 = vsel %vm480, %v1011, %v936
      %v1020 = vsel %vm480, %v1012, %v938
      %v1021 = vsel %vm480, %v1013, %v940
      %v1022 = vsel %vm480, %v1014, %v942
      %v1023 = vsel %vm480, %v1015, %v944
      %v1024 = vsel %vm480, %v1016, %v946
      %v1025 = vsel %vm480, %v1017, %v948
      %v1026 = vpack.c.bf16 %v1019, %v1018
      %v1027 = vpack.c.bf16 %v1021, %v1020
      %v1028 = vpack.c.bf16 %v1023, %v1022
      %v1029 = vpack.c.bf16 %v1025, %v1024
      %v1030 = vld [vmem:[%s2] sm:$0xf]
      %v1031 = vld [vmem:[%s2 + $0x4] sm:$0xf]
      %v1032 = vld [vmem:[%s2 + $0x8] sm:$0xf]
      %v1033 = vld [vmem:[%s2 + $0xc] sm:$0xf]
      %v1034 = vld [vmem:[%s2 + $0x10] sm:$0x3]
      %v1035 = vld [vmem:[#allocation3] sm:$0xff]
      %v1036 = vld [vmem:[#allocation3 + $0x10] sm:$0xff]
      %v1037 = vld [vmem:[#allocation3 + $0x20] sm:$0xff]
      %v1038 = vld [vmem:[#allocation3 + $0x30] sm:$0xff]
      %v1039 = vld [vmem:[#allocation3 + $0x40] sm:$0xff]
      %v1040 = vld [vmem:[#allocation3 + $0x50] sm:$0xff]
      %v1041 = vld [vmem:[#allocation3 + $0x60] sm:$0xff]
      %v1042 = vld [vmem:[#allocation3 + $0x70] sm:$0xff]
      %v1043 = vld [vmem:[#allocation3 + $0x1] sm:$0xff]
      %v1044 = vld [vmem:[#allocation3 + $0x11] sm:$0xff]
      %v1045 = vld [vmem:[#allocation3 + $0x21] sm:$0xff]
      %v1046 = vld [vmem:[#allocation3 + $0x31] sm:$0xff]
      %v1047 = vld [vmem:[#allocation3 + $0x41] sm:$0xff]
      %v1048 = vld [vmem:[#allocation3 + $0x51] sm:$0xff]
      %v1049 = vld [vmem:[#allocation3 + $0x61] sm:$0xff]
      %v1050 = vld [vmem:[#allocation3 + $0x71] sm:$0xff]
      %v1051 = vld [vmem:[#allocation3 + $0x2] sm:$0xff]
      %v1052 = vld [vmem:[#allocation3 + $0x12] sm:$0xff]
      %v1053 = vld [vmem:[#allocation3 + $0x22] sm:$0xff]
      %v1054 = vld [vmem:[#allocation3 + $0x32] sm:$0xff]
      %v1055 = vld [vmem:[#allocation3 + $0x42] sm:$0xff]
      %v1056 = vld [vmem:[#allocation3 + $0x52] sm:$0xff]
      %v1057 = vld [vmem:[#allocation3 + $0x62] sm:$0xff]
      %v1058 = vld [vmem:[#allocation3 + $0x72] sm:$0xff]
      %v1059 = vld [vmem:[%s619] sm:$0xff]
      %v1060 = vld [vmem:[%s619 + $0x10] sm:$0xff]
      %v1061 = vld [vmem:[%s619 + $0x20] sm:$0xff]
      %v1062 = vld [vmem:[%s619 + $0x30] sm:$0xff]
      %v1063 = vld [vmem:[%s619 + $0x40] sm:$0xff]
      %v1064 = vld [vmem:[%s619 + $0x50] sm:$0xff]
      %v1065 = vld [vmem:[%s619 + $0x60] sm:$0xff]
      %v1066 = vld [vmem:[%s619 + $0x70] sm:$0xff]
      %v1067 = vld [vmem:[%s619 + $0x1] sm:$0xff]
      %v1068 = vld [vmem:[%s619 + $0x11] sm:$0xff]
      %v1069 = vld [vmem:[%s619 + $0x21] sm:$0xff]
      %v1070 = vld [vmem:[%s619 + $0x31] sm:$0xff]
      %v1071 = vld [vmem:[%s619 + $0x41] sm:$0xff]
      %v1072 = vld [vmem:[%s619 + $0x51] sm:$0xff]
      %v1073 = vld [vmem:[%s619 + $0x61] sm:$0xff]
      %v1074 = vld [vmem:[%s619 + $0x71] sm:$0xff]
      %v1075 = vld [vmem:[%s619 + $0x2] sm:$0xff]
      %v1076 = vld [vmem:[%s619 + $0x12] sm:$0xff]
      %v1077 = vld [vmem:[%s619 + $0x22] sm:$0xff]
      %v1078 = vld [vmem:[%s619 + $0x32] sm:$0xff]
      %v1079 = vld [vmem:[%s619 + $0x42] sm:$0xff]
      %v1080 = vld [vmem:[%s619 + $0x52] sm:$0xff]
      %v1081 = vld [vmem:[%s619 + $0x62] sm:$0xff]
      %v1082 = vld [vmem:[%s619 + $0x72] sm:$0xff]
      %s1083 = scalar_lea.vmem [#allocation3], 32
      %v1084 = vld [vmem:[%s1083] sm:$0xff]
      %v1085 = vld [vmem:[%s1083 + $0x10] sm:$0xff]
      %v1086 = vld [vmem:[%s1083 + $0x20] sm:$0xff]
      %v1087 = vld [vmem:[%s1083 + $0x30] sm:$0xff]
      %v1088 = vld [vmem:[%s1083 + $0x40] sm:$0xff]
      %v1089 = vld [vmem:[%s1083 + $0x50] sm:$0xff]
      %v1090 = vld [vmem:[%s1083 + $0x60] sm:$0xff]
      %v1091 = vld [vmem:[%s1083 + $0x70] sm:$0xff]
      %v1092 = vld [vmem:[%s1083 + $0x1] sm:$0xff]
      %v1093 = vld [vmem:[%s1083 + $0x11] sm:$0xff]
      %v1094 = vld [vmem:[%s1083 + $0x21] sm:$0xff]
      %v1095 = vld [vmem:[%s1083 + $0x31] sm:$0xff]
      %v1096 = vld [vmem:[%s1083 + $0x41] sm:$0xff]
      %v1097 = vld [vmem:[%s1083 + $0x51] sm:$0xff]
      %v1098 = vld [vmem:[%s1083 + $0x61] sm:$0xff]
      %v1099 = vld [vmem:[%s1083 + $0x71] sm:$0xff]
      %v1100 = vld [vmem:[%s1083 + $0x2] sm:$0xff]
      %v1101 = vld [vmem:[%s1083 + $0x12] sm:$0xff]
      %v1102 = vld [vmem:[%s1083 + $0x22] sm:$0xff]
      %v1103 = vld [vmem:[%s1083 + $0x32] sm:$0xff]
      %v1104 = vld [vmem:[%s1083 + $0x42] sm:$0xff]
      %v1105 = vld [vmem:[%s1083 + $0x52] sm:$0xff]
      %v1106 = vld [vmem:[%s1083 + $0x62] sm:$0xff]
      %v1107 = vld [vmem:[%s1083 + $0x72] sm:$0xff]
      %1116 = vrot.lane.b32.xlu0 %v1043, 32
      %v1117 = vpop.permute.xlu0 %1116
      %1118 = vrot.lane.b32.xlu0 %v1044, 32
      %v1119 = vpop.permute.xlu0 %1118
      %1120 = vrot.lane.b32.xlu0 %v1045, 32
      %v1121 = vpop.permute.xlu0 %1120
      %1122 = vrot.lane.b32.xlu0 %v1046, 32
      %v1123 = vpop.permute.xlu0 %1122
      %1124 = vrot.lane.b32.xlu0 %v1047, 32
      %v1125 = vpop.permute.xlu0 %1124
      %1126 = vrot.lane.b32.xlu0 %v1048, 32
      %v1127 = vpop.permute.xlu0 %1126
      %1128 = vrot.lane.b32.xlu0 %v1049, 32
      %v1129 = vpop.permute.xlu0 %1128
      %1130 = vrot.lane.b32.xlu0 %v1050, 32
      %v1131 = vpop.permute.xlu0 %1130
      %1148 = vrot.lane.b32.xlu0 %v1051, 64
      %v1149 = vpop.permute.xlu0 %1148
      %1150 = vrot.lane.b32.xlu0 %v1052, 64
      %v1151 = vpop.permute.xlu0 %1150
      %1152 = vrot.lane.b32.xlu0 %v1053, 64
      %v1153 = vpop.permute.xlu0 %1152
      %1154 = vrot.lane.b32.xlu0 %v1054, 64
      %v1155 = vpop.permute.xlu0 %1154
      %1156 = vrot.lane.b32.xlu0 %v1055, 64
      %v1157 = vpop.permute.xlu0 %1156
      %1158 = vrot.lane.b32.xlu0 %v1056, 64
      %v1159 = vpop.permute.xlu0 %1158
      %1160 = vrot.lane.b32.xlu0 %v1057, 64
      %v1161 = vpop.permute.xlu0 %1160
      %1162 = vrot.lane.b32.xlu0 %v1058, 64
      %v1163 = vpop.permute.xlu0 %1162
      %1180 = vrot.lane.b32.xlu0 %v1059, 96
      %v1181 = vpop.permute.xlu0 %1180
      %1182 = vrot.lane.b32.xlu0 %v1060, 96
      %v1183 = vpop.permute.xlu0 %1182
      %1184 = vrot.lane.b32.xlu0 %v1061, 96
      %v1185 = vpop.permute.xlu0 %1184
      %1186 = vrot.lane.b32.xlu0 %v1062, 96
      %v1187 = vpop.permute.xlu0 %1186
      %1188 = vrot.lane.b32.xlu0 %v1063, 96
      %v1189 = vpop.permute.xlu0 %1188
      %1190 = vrot.lane.b32.xlu0 %v1064, 96
      %v1191 = vpop.permute.xlu0 %1190
      %1192 = vrot.lane.b32.xlu0 %v1065, 96
      %v1193 = vpop.permute.xlu0 %1192
      %1194 = vrot.lane.b32.xlu0 %v1066, 96
      %v1195 = vpop.permute.xlu0 %1194
      %1212 = vrot.lane.b32.xlu0 %v1075, 32
      %v1213 = vpop.permute.xlu0 %1212
      %1214 = vrot.lane.b32.xlu0 %v1076, 32
      %v1215 = vpop.permute.xlu0 %1214
      %1216 = vrot.lane.b32.xlu0 %v1077, 32
      %v1217 = vpop.permute.xlu0 %1216
      %1218 = vrot.lane.b32.xlu0 %v1078, 32
      %v1219 = vpop.permute.xlu0 %1218
      %1220 = vrot.lane.b32.xlu0 %v1079, 32
      %v1221 = vpop.permute.xlu0 %1220
      %1222 = vrot.lane.b32.xlu0 %v1080, 32
      %v1223 = vpop.permute.xlu0 %1222
      %1224 = vrot.lane.b32.xlu0 %v1081, 32
      %v1225 = vpop.permute.xlu0 %1224
      %1226 = vrot.lane.b32.xlu0 %v1082, 32
      %v1227 = vpop.permute.xlu0 %1226
      %1244 = vrot.lane.b32.xlu0 %v1084, 64
      %v1245 = vpop.permute.xlu0 %1244
      %1246 = vrot.lane.b32.xlu0 %v1085, 64
      %v1247 = vpop.permute.xlu0 %1246
      %1248 = vrot.lane.b32.xlu0 %v1086, 64
      %v1249 = vpop.permute.xlu0 %1248
      %1250 = vrot.lane.b32.xlu0 %v1087, 64
      %v1251 = vpop.permute.xlu0 %1250
      %1252 = vrot.lane.b32.xlu0 %v1088, 64
      %v1253 = vpop.permute.xlu0 %1252
      %1254 = vrot.lane.b32.xlu0 %v1089, 64
      %v1255 = vpop.permute.xlu0 %1254
      %1256 = vrot.lane.b32.xlu0 %v1090, 64
      %v1257 = vpop.permute.xlu0 %1256
      %1258 = vrot.lane.b32.xlu0 %v1091, 64
      %v1259 = vpop.permute.xlu0 %1258
      %1276 = vrot.lane.b32.xlu0 %v1092, 96
      %v1277 = vpop.permute.xlu0 %1276
      %1278 = vrot.lane.b32.xlu0 %v1093, 96
      %v1279 = vpop.permute.xlu0 %1278
      %1280 = vrot.lane.b32.xlu0 %v1094, 96
      %v1281 = vpop.permute.xlu0 %1280
      %1282 = vrot.lane.b32.xlu0 %v1095, 96
      %v1283 = vpop.permute.xlu0 %1282
      %1284 = vrot.lane.b32.xlu0 %v1096, 96
      %v1285 = vpop.permute.xlu0 %1284
      %1286 = vrot.lane.b32.xlu0 %v1097, 96
      %v1287 = vpop.permute.xlu0 %1286
      %1288 = vrot.lane.b32.xlu0 %v1098, 96
      %v1289 = vpop.permute.xlu0 %1288
      %1290 = vrot.lane.b32.xlu0 %v1099, 96
      %v1291 = vpop.permute.xlu0 %1290
      %v1300 = vsel %vm480, %v1035, %v1117
      %v1301 = vsel %vm480, %v1036, %v1119
      %v1302 = vsel %vm480, %v1037, %v1121
      %v1303 = vsel %vm480, %v1038, %v1123
      %v1304 = vsel %vm480, %v1039, %v1125
      %v1305 = vsel %vm480, %v1040, %v1127
      %v1306 = vsel %vm480, %v1041, %v1129
      %v1307 = vsel %vm480, %v1042, %v1131
      %vm1308 = vcmask 523264
      %v1309 = vsel %vm1308, %v1300, %v1149
      %v1310 = vsel %vm1308, %v1301, %v1151
      %v1311 = vsel %vm1308, %v1302, %v1153
      %v1312 = vsel %vm1308, %v1303, %v1155
      %v1313 = vsel %vm1308, %v1304, %v1157
      %v1314 = vsel %vm1308, %v1305, %v1159
      %v1315 = vsel %vm1308, %v1306, %v1161
      %v1316 = vsel %vm1308, %v1307, %v1163
      %vm1317 = vcmask 785408
      %v1318 = vsel %vm1317, %v1309, %v1181
      %v1319 = vsel %vm1317, %v1310, %v1183
      %v1320 = vsel %vm1317, %v1311, %v1185
      %v1321 = vsel %vm1317, %v1312, %v1187
      %v1322 = vsel %vm1317, %v1313, %v1189
      %v1323 = vsel %vm1317, %v1314, %v1191
      %v1324 = vsel %vm1317, %v1315, %v1193
      %v1325 = vsel %vm1317, %v1316, %v1195
      %v1326 = vsel %vm480, %v1067, %v1213
      %v1327 = vsel %vm480, %v1068, %v1215
      %v1328 = vsel %vm480, %v1069, %v1217
      %v1329 = vsel %vm480, %v1070, %v1219
      %v1330 = vsel %vm480, %v1071, %v1221
      %v1331 = vsel %vm480, %v1072, %v1223
      %v1332 = vsel %vm480, %v1073, %v1225
      %v1333 = vsel %vm480, %v1074, %v1227
      %v1334 = vsel %vm1308, %v1326, %v1245
      %v1335 = vsel %vm1308, %v1327, %v1247
      %v1336 = vsel %vm1308, %v1328, %v1249
      %v1337 = vsel %vm1308, %v1329, %v1251
      %v1338 = vsel %vm1308, %v1330, %v1253
      %v1339 = vsel %vm1308, %v1331, %v1255
      %v1340 = vsel %vm1308, %v1332, %v1257
      %v1341 = vsel %vm1308, %v1333, %v1259
      %v1342 = vsel %vm1317, %v1334, %v1277
      %v1343 = vsel %vm1317, %v1335, %v1279
      %v1344 = vsel %vm1317, %v1336, %v1281
      %v1345 = vsel %vm1317, %v1337, %v1283
      %v1346 = vsel %vm1317, %v1338, %v1285
      %v1347 = vsel %vm1317, %v1339, %v1287
      %v1348 = vsel %vm1317, %v1340, %v1289
      %v1349 = vsel %vm1317, %v1341, %v1291
      %v1350 = vpack.c.bf16 %v1319, %v1318
      %v1351 = vpack.c.bf16 %v1343, %v1342
      %v1352 = vpack.c.bf16 %v1101, %v1100
      %v1353 = vpack.c.bf16 %v1321, %v1320
      %v1354 = vpack.c.bf16 %v1345, %v1344
      %v1355 = vpack.c.bf16 %v1103, %v1102
      %v1356 = vpack.c.bf16 %v1323, %v1322
      %v1357 = vpack.c.bf16 %v1347, %v1346
      %v1358 = vpack.c.bf16 %v1105, %v1104
      %v1359 = vpack.c.bf16 %v1325, %v1324
      %v1360 = vpack.c.bf16 %v1349, %v1348
      %v1361 = vpack.c.bf16 %v1107, %v1106
      %v1362 = vld [vmem:[%s3] sm:$0xf]
      %v1363 = vld [vmem:[%s3 + $0x4] sm:$0xf]
      %v1364 = vld [vmem:[%s3 + $0x8] sm:$0xf]
      %v1365 = vld [vmem:[%s3 + $0xc] sm:$0xf]
      %v1366 = vld [vmem:[%s3 + $0x10] sm:$0xf]
      %v1367 = vld [vmem:[%s3 + $0x14] sm:$0xf]
      %v1368 = vld [vmem:[%s3 + $0x18] sm:$0xf]
      %v1369 = vld [vmem:[%s3 + $0x1c] sm:$0xf]
      %v1370 = vld [vmem:[%s3 + $0x20] sm:$0xf]
      %v1371 = vld [vmem:[%s3 + $0x24] sm:$0xf]
      %v1372 = vld [vmem:[%s3 + $0x28] sm:$0xf]
      %v1373 = vld [vmem:[%s3 + $0x2c] sm:$0xf]
      %v1374 = vld [vmem:[%s3 + $0x30] sm:$0xf]
      %v1375 = vld [vmem:[%s3 + $0x34] sm:$0xf]
      %v1376 = vld [vmem:[%s3 + $0x38] sm:$0xf]
      %v1377 = vld [vmem:[%s3 + $0x3c] sm:$0xf]
      %v1378 = vld [vmem:[%s3 + $0x40] sm:$0xf]
      %v1379 = vld [vmem:[%s3 + $0x44] sm:$0xf]
      %v1380 = vld [vmem:[%s3 + $0x48] sm:$0xf]
      %v1381 = vld [vmem:[%s3 + $0x4c] sm:$0xf]
      %v1382 = vld [vmem:[%s3 + $0x50] sm:$0xf]
      %v1383 = vld [vmem:[%s3 + $0x54] sm:$0xf]
      %v1384 = vld [vmem:[%s3 + $0x58] sm:$0xf]
      %v1385 = vld [vmem:[%s3 + $0x5c] sm:$0xf]
      %v1386 = vld [vmem:[%s3 + $0x60] sm:$0xf]
      %v1387 = vld [vmem:[%s3 + $0x64] sm:$0xf]
      %v1388 = vld [vmem:[%s3 + $0x68] sm:$0xf]
      %v1389 = vld [vmem:[%s3 + $0x6c] sm:$0xf]
      %v1390 = vld [vmem:[%s3 + $0x70] sm:$0xf]
      %v1391 = vld [vmem:[%s3 + $0x74] sm:$0xf]
      %v1392 = vld [vmem:[%s3 + $0x78] sm:$0xf]
      %v1393 = vld [vmem:[%s3 + $0x7c] sm:$0xf]
      %v1394 = vld [vmem:[%s3 + $0x80] sm:$0xf]
      %v1395 = vld [vmem:[%s3 + $0x84] sm:$0xf]
      %v1396 = vld [vmem:[%s3 + $0x88] sm:$0xf]
      %v1397 = vld [vmem:[%s3 + $0x8c] sm:$0xf]
      %v1434 = vunpack.c.l.b16 %v1362
      %v1435 = vunpack.c.l.b16 %v1363
      %v1436 = vunpack.c.l.b16 %v1364
      %v1437 = vunpack.c.l.b16 %v1365
      %v1438 = vunpack.c.l.b16 %v1366
      %v1439 = vunpack.c.l.b16 %v1367
      %v1440 = vunpack.c.l.b16 %v1368
      %v1441 = vunpack.c.l.b16 %v1369
      %v1442 = vunpack.c.l.b16 %v1370
      %v1443 = vunpack.c.l.b16 %v1371
      %v1444 = vunpack.c.l.b16 %v1372
      %v1445 = vunpack.c.l.b16 %v1373
      %v1446 = vunpack.c.l.b16 %v1374
      %v1447 = vunpack.c.l.b16 %v1375
      %v1448 = vunpack.c.l.b16 %v1376
      %v1449 = vunpack.c.l.b16 %v1377
      %v1450 = vunpack.c.l.b16 %v1378
      %v1451 = vunpack.c.l.b16 %v1379
      %v1452 = vunpack.c.l.b16 %v1380
      %v1453 = vunpack.c.l.b16 %v1381
      %v1454 = vunpack.c.l.b16 %v1382
      %v1455 = vunpack.c.l.b16 %v1383
      %v1456 = vunpack.c.l.b16 %v1384
      %v1457 = vunpack.c.l.b16 %v1385
      %v1458 = vunpack.c.l.b16 %v1386
      %v1459 = vunpack.c.l.b16 %v1387
      %v1460 = vunpack.c.l.b16 %v1388
      %v1461 = vunpack.c.l.b16 %v1389
      %v1462 = vunpack.c.l.b16 %v1390
      %v1463 = vunpack.c.l.b16 %v1391
      %v1464 = vunpack.c.l.b16 %v1392
      %v1465 = vunpack.c.l.b16 %v1393
      %v1466 = vunpack.c.l.b16 %v1394
      %v1467 = vunpack.c.l.b16 %v1395
      %v1468 = vunpack.c.l.b16 %v1396
      %v1469 = vunpack.c.l.b16 %v1397
      %v1470 = vpack.c.b16 %v1435, %v1434
      %v1471 = vpack.c.b16 %v1437, %v1436
      %v1472 = vpack.c.b16 %v1439, %v1438
      %v1473 = vpack.c.b16 %v1441, %v1440
      %v1474 = vpack.c.b16 %v1443, %v1442
      %v1475 = vpack.c.b16 %v1445, %v1444
      %v1476 = vpack.c.b16 %v1447, %v1446
      %v1477 = vpack.c.b16 %v1449, %v1448
      %v1478 = vpack.c.b16 %v1451, %v1450
      %v1479 = vpack.c.b16 %v1453, %v1452
      %v1480 = vpack.c.b16 %v1455, %v1454
      %v1481 = vpack.c.b16 %v1457, %v1456
      %v1482 = vpack.c.b16 %v1459, %v1458
      %v1483 = vpack.c.b16 %v1461, %v1460
      %v1484 = vpack.c.b16 %v1463, %v1462
      %v1485 = vpack.c.b16 %v1465, %v1464
      %v1486 = vpack.c.b16 %v1467, %v1466
      %v1487 = vpack.c.b16 %v1469, %v1468
      %v1507 = vsel %vm480, %v1352, 0
      %v1510 = vsel %vm480, %v1355, 0
      %v1513 = vsel %vm480, %v1358, 0
      %v1516 = vsel %vm480, %v1361, 0
      %1518 = vmatprep.subr.bf16.mxu0 0
      %1519 = vmatpush1.bf16.msra.mxu0 %v1477
      %1520 = vmatprep.subr.bf16.mxu0 0
      %1521 = vmatpush1.bf16.msra.mxu0 %v1476
      %1522 = vmatprep.subr.bf16.mxu0 0
      %1523 = vmatpush1.bf16.msra.mxu0 %v1475
      %1524 = vmatprep.subr.bf16.mxu0 0
      %1525 = vmatpush1.bf16.msra.mxu0 %v1474
      %1526 = vmatprep.subr.bf16.mxu0 0
      %1527 = vmatpush1.bf16.msra.mxu0 %v1473
      %1528 = vmatprep.subr.bf16.mxu0 0
      %1529 = vmatpush1.bf16.msra.mxu0 %v1472
      %1530 = vmatprep.subr.bf16.mxu0 0
      %1531 = vmatpush1.bf16.msra.mxu0 %v1471
      %1532 = vmatprep.subr.bf16.mxu0 0
      %1533 = vmatpush1.bf16.msra.mxu0 %v1470
      %1534 = vmatprep.subr.bf16.mxu0 0
      %1535 = vmatpush2.bf16.msra.mxu0 %v1485
      %1536 = vmatprep.subr.bf16.mxu0 0
      %1537 = vmatpush2.bf16.msra.mxu0 %v1484
      %1538 = vmatprep.subr.bf16.mxu0 0
      %1539 = vmatpush2.bf16.msra.mxu0 %v1483
      %1540 = vmatprep.subr.bf16.mxu0 0
      %1541 = vmatpush2.bf16.msra.mxu0 %v1482
      %1542 = vmatprep.subr.bf16.mxu0 0
      %1543 = vmatpush2.bf16.msra.mxu0 %v1481
      %1544 = vmatprep.subr.bf16.mxu0 0
      %1545 = vmatpush2.bf16.msra.mxu0 %v1480
      %1546 = vmatprep.subr.bf16.mxu0 0
      %1547 = vmatpush2.bf16.msra.mxu0 %v1479
      %1548 = vmatprep.subr.bf16.mxu0 0
      %1549 = vmatpush2.bf16.msra.mxu0 %v1478
      %1550 = vmatprep.mubr.bf16.mxu0 %v1351
      %1551 = vmatmul.mubr.bf16.gmra.mxu0 %v1350
      %v1552 = vpop.f32.mrf.mxu0
      %v1553 = vadd.f32 0.0, %v1552
      %v1554 = vpop.f32.mrf.mxu0
      %v1555 = vpop.f32.mrf.mxu0
      %v1556 = vadd.f32 0.0, %v1555
      %v1557 = vpop.f32.mrf.mxu0
      %1558 = vmatprep.mubr.bf16.mxu0 %v1354
      %1559 = vmatmul.mubr.bf16.gmra.mxu0 %v1353
      %v1560 = vpop.f32.mrf.mxu0
      %v1561 = vadd.f32 0.0, %v1560
      %v1562 = vpop.f32.mrf.mxu0
      %v1563 = vpop.f32.mrf.mxu0
      %v1564 = vadd.f32 0.0, %v1563
      %v1565 = vpop.f32.mrf.mxu0
      %1566 = vmatprep.mubr.bf16.mxu0 %v1357
      %1567 = vmatmul.mubr.bf16.gmra.mxu0 %v1356
      %v1568 = vpop.f32.mrf.mxu0
      %v1569 = vadd.f32 0.0, %v1568
      %v1570 = vpop.f32.mrf.mxu0
      %v1571 = vpop.f32.mrf.mxu0
      %v1572 = vadd.f32 0.0, %v1571
      %v1573 = vpop.f32.mrf.mxu0
      %1574 = vmatprep.mubr.bf16.mxu0 %v1360
      %1575 = vmatmul.mubr.bf16.gmra.mxu0 %v1359
      %v1576 = vpop.f32.mrf.mxu0
      %v1577 = vadd.f32 0.0, %v1576
      %v1578 = vpop.f32.mrf.mxu0
      %v1579 = vpop.f32.mrf.mxu0
      %v1580 = vadd.f32 0.0, %v1579
      %v1581 = vpop.f32.mrf.mxu0
      %1582 = vdwg.mxu0
      %1583 = vmatprep.subr.bf16.mxu0 0
      %1584 = vmatpush1.bf16.msra.mxu0 0
      %1585 = vmatprep.subr.bf16.mxu0 0
      %1586 = vmatpush1.bf16.msra.mxu0 0
      %1587 = vmatprep.subr.bf16.mxu0 0
      %1588 = vmatpush1.bf16.msra.mxu0 0
      %1589 = vmatprep.subr.bf16.mxu0 0
      %1590 = vmatpush1.bf16.msra.mxu0 0
      %1591 = vmatprep.subr.bf16.mxu0 0
      %1592 = vmatpush1.bf16.msra.mxu0 0
      %1593 = vmatprep.subr.bf16.mxu0 0
      %1594 = vmatpush1.bf16.msra.mxu0 0
      %1595 = vmatprep.subr.bf16.mxu0 0
      %1596 = vmatpush1.bf16.msra.mxu0 %v1487
      %1597 = vmatprep.subr.bf16.mxu0 0
      %1598 = vmatpush1.bf16.msra.mxu0 %v1486
      %1599 = vmatprep.subr.bf16.mxu0 0
      %1600 = vmatpush2.bf16.msra.mxu0 0
      %1601 = vmatprep.subr.bf16.mxu0 0
      %1602 = vmatpush2.bf16.msra.mxu0 0
      %1603 = vmatprep.subr.bf16.mxu0 0
      %1604 = vmatpush2.bf16.msra.mxu0 0
      %1605 = vmatprep.subr.bf16.mxu0 0
      %1606 = vmatpush2.bf16.msra.mxu0 0
      %1607 = vmatprep.subr.bf16.mxu0 0
      %1608 = vmatpush2.bf16.msra.mxu0 0
      %1609 = vmatprep.subr.bf16.mxu0 0
      %1610 = vmatpush2.bf16.msra.mxu0 0
      %1611 = vmatprep.subr.bf16.mxu0 0
      %1612 = vmatpush2.bf16.msra.mxu0 0
      %1613 = vmatprep.subr.bf16.mxu0 0
      %1614 = vmatpush2.bf16.msra.mxu0 0
      %1615 = vmatprep.mubr.bf16.mxu0 0
      %1616 = vmatmul.mubr.bf16.gmra.mxu0 %v1507
      %v1617 = vpop.f32.mrf.mxu0
      %v1618 = vadd.f32 %v1553, %v1617
      %v1619 = vpop.f32.mrf.mxu0
      %v1620 = vpop.f32.mrf.mxu0
      %v1621 = vadd.f32 %v1556, %v1620
      %v1622 = vpop.f32.mrf.mxu0
      %1623 = vmatprep.mubr.bf16.mxu0 0
      %1624 = vmatmul.mubr.bf16.gmra.mxu0 %v1510
      %v1625 = vpop.f32.mrf.mxu0
      %v1626 = vadd.f32 %v1561, %v1625
      %v1627 = vpop.f32.mrf.mxu0
      %v1628 = vpop.f32.mrf.mxu0
      %v1629 = vadd.f32 %v1564, %v1628
      %v1630 = vpop.f32.mrf.mxu0
      %1631 = vmatprep.mubr.bf16.mxu0 0
      %1632 = vmatmul.mubr.bf16.gmra.mxu0 %v1513
      %v1633 = vpop.f32.mrf.mxu0
      %v1634 = vadd.f32 %v1569, %v1633
      %v1635 = vpop.f32.mrf.mxu0
      %v1636 = vpop.f32.mrf.mxu0
      %v1637 = vadd.f32 %v1572, %v1636
      %v1638 = vpop.f32.mrf.mxu0
      %1639 = vmatprep.mubr.bf16.mxu0 0
      %1640 = vmatmul.mubr.bf16.gmra.mxu0 %v1516
      %v1641 = vpop.f32.mrf.mxu0
      %v1642 = vadd.f32 %v1577, %v1641
      %v1643 = vpop.f32.mrf.mxu0
      %v1644 = vpop.f32.mrf.mxu0
      %v1645 = vadd.f32 %v1580, %v1644
      %v1646 = vpop.f32.mrf.mxu0
      %1647 = vdwg.mxu0
      %v1653 = vunpack.c.l.b16 %v1030
      %v1654 = vunpack.c.l.b16 %v1031
      %v1655 = vunpack.c.l.b16 %v1032
      %v1656 = vunpack.c.l.b16 %v1033
      %v1657 = vunpack.c.l.b16 %v1034
      %v1658 = vpack.c.b16 %v1654, %v1653
      %v1659 = vpack.c.b16 %v1656, %v1655
      %v1660 = vpack.c.b16 %v1657, %v1657
      %vm1663 = vcmask 293888
      %v1665 = vsel %vm1663, %v1026, 0
      %v1668 = vsel %vm1663, %v1027, 0
      %v1671 = vsel %vm1663, %v1028, 0
      %v1674 = vsel %vm1663, %v1029, 0
      %vm1676 = vcmask 1041408
      %v1678 = vsel %vm1676, %v1660, 0
      %1680 = vmatprep.subr.bf16.mxu0 0
      %1681 = vmatpush1.bf16.msra.mxu0 0
      %1682 = vmatprep.subr.bf16.mxu0 0
      %1683 = vmatpush1.bf16.msra.mxu0 0
      %1684 = vmatprep.subr.bf16.mxu0 0
      %1685 = vmatpush1.bf16.msra.mxu0 0
      %1686 = vmatprep.subr.bf16.mxu0 0
      %1687 = vmatpush1.bf16.msra.mxu0 0
      %1688 = vmatprep.subr.bf16.mxu0 0
      %1689 = vmatpush1.bf16.msra.mxu0 0
      %1690 = vmatprep.subr.bf16.mxu0 0
      %1691 = vmatpush1.bf16.msra.mxu0 %v1678
      %1692 = vmatprep.subr.bf16.mxu0 0
      %1693 = vmatpush1.bf16.msra.mxu0 %v1659
      %1694 = vmatprep.subr.bf16.mxu0 0
      %1695 = vmatpush1.bf16.msra.mxu0 %v1658
      %1696 = vmatprep.subr.bf16.mxu0 0
      %1697 = vmatpush2.bf16.msra.mxu0 0
      %1698 = vmatprep.subr.bf16.mxu0 0
      %1699 = vmatpush2.bf16.msra.mxu0 0
      %1700 = vmatprep.subr.bf16.mxu0 0
      %1701 = vmatpush2.bf16.msra.mxu0 0
      %1702 = vmatprep.subr.bf16.mxu0 0
      %1703 = vmatpush2.bf16.msra.mxu0 0
      %1704 = vmatprep.subr.bf16.mxu0 0
      %1705 = vmatpush2.bf16.msra.mxu0 0
      %1706 = vmatprep.subr.bf16.mxu0 0
      %1707 = vmatpush2.bf16.msra.mxu0 0
      %1708 = vmatprep.subr.bf16.mxu0 0
      %1709 = vmatpush2.bf16.msra.mxu0 0
      %1710 = vmatprep.subr.bf16.mxu0 0
      %1711 = vmatpush2.bf16.msra.mxu0 0
      %1712 = vmatprep.mubr.bf16.mxu0 0
      %1713 = vmatmul.mubr.bf16.gmra.mxu0 %v1665
      %v1714 = vpop.f32.mrf.mxu0
      %v1715 = vadd.f32 %v1618, %v1714
      %v1716 = vpop.f32.mrf.mxu0
      %v1717 = vpop.f32.mrf.mxu0
      %v1718 = vadd.f32 %v1621, %v1717
      %v1719 = vpop.f32.mrf.mxu0
      %1720 = vmatprep.mubr.bf16.mxu0 0
      %1721 = vmatmul.mubr.bf16.gmra.mxu0 %v1668
      %v1722 = vpop.f32.mrf.mxu0
      %v1723 = vadd.f32 %v1626, %v1722
      %v1724 = vpop.f32.mrf.mxu0
      %v1725 = vpop.f32.mrf.mxu0
      %v1726 = vadd.f32 %v1629, %v1725
      %v1727 = vpop.f32.mrf.mxu0
      %1728 = vmatprep.mubr.bf16.mxu0 0
      %1729 = vmatmul.mubr.bf16.gmra.mxu0 %v1671
      %v1730 = vpop.f32.mrf.mxu0
      %v1731 = vadd.f32 %v1634, %v1730
      %v1732 = vpop.f32.mrf.mxu0
      %v1733 = vpop.f32.mrf.mxu0
      %v1734 = vadd.f32 %v1637, %v1733
      %v1735 = vpop.f32.mrf.mxu0
      %1736 = vmatprep.mubr.bf16.mxu0 0
      %1737 = vmatmul.mubr.bf16.gmra.mxu0 %v1674
      %v1738 = vpop.f32.mrf.mxu0
      %v1739 = vadd.f32 %v1642, %v1738
      %v1740 = vpop.f32.mrf.mxu0
      %v1741 = vpop.f32.mrf.mxu0
      %v1742 = vadd.f32 %v1645, %v1741
      %v1743 = vpop.f32.mrf.mxu0
      %1744 = vdwg.mxu0
      %v1745 = vld [vmem:[%s4] sm:$0x1]
      %v1746 = vld [vmem:[%s5] sm:$0x1]
      %v1748 = vlaneseq
      %v1749 = vshrl.u32 %v1748, 7
      %v1750 = vsub.s32 0, %v1749
      %v1751 = vrot.slane %v1745, %v1750
      %v1753 = vmul.f32 %v1715, %v1751
      %v1754 = vmul.f32 %v1718, %v1751
      %v1755 = vmul.f32 %v1723, %v1751
      %v1756 = vmul.f32 %v1726, %v1751
      %v1757 = vmul.f32 %v1731, %v1751
      %v1758 = vmul.f32 %v1734, %v1751
      %v1759 = vmul.f32 %v1739, %v1751
      %v1760 = vmul.f32 %v1742, %v1751
      %v1762 = vlaneseq
      %v1763 = vshrl.u32 %v1762, 7
      %v1764 = vsub.s32 0, %v1763
      %v1765 = vrot.slane %v1746, %v1764
      %v1767 = vadd.f32 %v1753, %v1765
      %v1768 = vadd.f32 %v1754, %v1765
      %v1769 = vadd.f32 %v1755, %v1765
      %v1770 = vadd.f32 %v1756, %v1765
      %v1771 = vadd.f32 %v1757, %v1765
      %v1772 = vadd.f32 %v1758, %v1765
      %v1773 = vadd.f32 %v1759, %v1765
      %v1774 = vadd.f32 %v1760, %v1765
      %v1775 = vmax.f32 %v1767, 0.0
      %v1776 = vmax.f32 %v1768, 0.0
      %v1777 = vmax.f32 %v1769, 0.0
      %v1778 = vmax.f32 %v1770, 0.0
      %v1779 = vmax.f32 %v1771, 0.0
      %v1780 = vmax.f32 %v1772, 0.0
      %v1781 = vmax.f32 %v1773, 0.0
      %v1782 = vmax.f32 %v1774, 0.0
      %s1783 = scalar_lea.vmem [#allocation4], 16
      %1784 = vst.msk [vmem:[%s1783 + $0x1] sm:$0xff] %vm580, %v1775
      %1785 = vst.msk [vmem:[%s1783 + $0x11] sm:$0xff] %vm580, %v1776
      %1786 = vst.msk [vmem:[%s1783 + $0x21] sm:$0xff] %vm580, %v1777
      %1787 = vst.msk [vmem:[%s1783 + $0x31] sm:$0xff] %vm580, %v1778
      %1788 = vst.msk [vmem:[%s1783 + $0x41] sm:$0xff] %vm580, %v1779
      %1789 = vst.msk [vmem:[%s1783 + $0x51] sm:$0xff] %vm580, %v1780
      %1790 = vst.msk [vmem:[%s1783 + $0x61] sm:$0xff] %vm580, %v1781
      %1791 = vst.msk [vmem:[%s1783 + $0x71] sm:$0xff] %vm580, %v1782
      %v1792 = vld [vmem:[#allocation4] sm:$0xff]
      %v1793 = vld [vmem:[#allocation4 + $0x10] sm:$0xff]
      %v1794 = vld [vmem:[#allocation4 + $0x20] sm:$0xff]
      %v1795 = vld [vmem:[#allocation4 + $0x30] sm:$0xff]
      %v1796 = vld [vmem:[#allocation4 + $0x40] sm:$0xff]
      %v1797 = vld [vmem:[#allocation4 + $0x50] sm:$0xff]
      %v1798 = vld [vmem:[#allocation4 + $0x60] sm:$0xff]
      %v1799 = vld [vmem:[#allocation4 + $0x70] sm:$0xff]
      %v1800 = vld [vmem:[#allocation4 + $0x1] sm:$0xff]
      %v1801 = vld [vmem:[#allocation4 + $0x11] sm:$0xff]
      %v1802 = vld [vmem:[#allocation4 + $0x21] sm:$0xff]
      %v1803 = vld [vmem:[#allocation4 + $0x31] sm:$0xff]
      %v1804 = vld [vmem:[#allocation4 + $0x41] sm:$0xff]
      %v1805 = vld [vmem:[#allocation4 + $0x51] sm:$0xff]
      %v1806 = vld [vmem:[#allocation4 + $0x61] sm:$0xff]
      %v1807 = vld [vmem:[#allocation4 + $0x71] sm:$0xff]
      %v1808 = vld [vmem:[#allocation4 + $0x2] sm:$0xff]
      %v1809 = vld [vmem:[#allocation4 + $0x12] sm:$0xff]
      %v1810 = vld [vmem:[#allocation4 + $0x22] sm:$0xff]
      %v1811 = vld [vmem:[#allocation4 + $0x32] sm:$0xff]
      %v1812 = vld [vmem:[#allocation4 + $0x42] sm:$0xff]
      %v1813 = vld [vmem:[#allocation4 + $0x52] sm:$0xff]
      %v1814 = vld [vmem:[#allocation4 + $0x62] sm:$0xff]
      %v1815 = vld [vmem:[#allocation4 + $0x72] sm:$0xff]
      %v1816 = vld [vmem:[%s1783] sm:$0xff]
      %v1817 = vld [vmem:[%s1783 + $0x10] sm:$0xff]
      %v1818 = vld [vmem:[%s1783 + $0x20] sm:$0xff]
      %v1819 = vld [vmem:[%s1783 + $0x30] sm:$0xff]
      %v1820 = vld [vmem:[%s1783 + $0x40] sm:$0xff]
      %v1821 = vld [vmem:[%s1783 + $0x50] sm:$0xff]
      %v1822 = vld [vmem:[%s1783 + $0x60] sm:$0xff]
      %v1823 = vld [vmem:[%s1783 + $0x70] sm:$0xff]
      %v1824 = vld [vmem:[%s1783 + $0x1] sm:$0xff]
      %v1825 = vld [vmem:[%s1783 + $0x11] sm:$0xff]
      %v1826 = vld [vmem:[%s1783 + $0x21] sm:$0xff]
      %v1827 = vld [vmem:[%s1783 + $0x31] sm:$0xff]
      %v1828 = vld [vmem:[%s1783 + $0x41] sm:$0xff]
      %v1829 = vld [vmem:[%s1783 + $0x51] sm:$0xff]
      %v1830 = vld [vmem:[%s1783 + $0x61] sm:$0xff]
      %v1831 = vld [vmem:[%s1783 + $0x71] sm:$0xff]
      %v1832 = vld [vmem:[%s1783 + $0x2] sm:$0xff]
      %v1833 = vld [vmem:[%s1783 + $0x12] sm:$0xff]
      %v1834 = vld [vmem:[%s1783 + $0x22] sm:$0xff]
      %v1835 = vld [vmem:[%s1783 + $0x32] sm:$0xff]
      %v1836 = vld [vmem:[%s1783 + $0x42] sm:$0xff]
      %v1837 = vld [vmem:[%s1783 + $0x52] sm:$0xff]
      %v1838 = vld [vmem:[%s1783 + $0x62] sm:$0xff]
      %v1839 = vld [vmem:[%s1783 + $0x72] sm:$0xff]
      %s1840 = scalar_lea.vmem [#allocation4], 32
      %v1841 = vld [vmem:[%s1840] sm:$0xff]
      %v1842 = vld [vmem:[%s1840 + $0x10] sm:$0xff]
      %v1843 = vld [vmem:[%s1840 + $0x20] sm:$0xff]
      %v1844 = vld [vmem:[%s1840 + $0x30] sm:$0xff]
      %v1845 = vld [vmem:[%s1840 + $0x40] sm:$0xff]
      %v1846 = vld [vmem:[%s1840 + $0x50] sm:$0xff]
      %v1847 = vld [vmem:[%s1840 + $0x60] sm:$0xff]
      %v1848 = vld [vmem:[%s1840 + $0x70] sm:$0xff]
      %v1849 = vld [vmem:[%s1840 + $0x1] sm:$0xff]
      %v1850 = vld [vmem:[%s1840 + $0x11] sm:$0xff]
      %v1851 = vld [vmem:[%s1840 + $0x21] sm:$0xff]
      %v1852 = vld [vmem:[%s1840 + $0x31] sm:$0xff]
      %v1853 = vld [vmem:[%s1840 + $0x41] sm:$0xff]
      %v1854 = vld [vmem:[%s1840 + $0x51] sm:$0xff]
      %v1855 = vld [vmem:[%s1840 + $0x61] sm:$0xff]
      %v1856 = vld [vmem:[%s1840 + $0x71] sm:$0xff]
      %v1857 = vld [vmem:[%s1840 + $0x2] sm:$0xff]
      %v1858 = vld [vmem:[%s1840 + $0x12] sm:$0xff]
      %v1859 = vld [vmem:[%s1840 + $0x22] sm:$0xff]
      %v1860 = vld [vmem:[%s1840 + $0x32] sm:$0xff]
      %v1861 = vld [vmem:[%s1840 + $0x42] sm:$0xff]
      %v1862 = vld [vmem:[%s1840 + $0x52] sm:$0xff]
      %v1863 = vld [vmem:[%s1840 + $0x62] sm:$0xff]
      %v1864 = vld [vmem:[%s1840 + $0x72] sm:$0xff]
      %1873 = vrot.lane.b32.xlu0 %v1800, 8
      %v1874 = vpop.permute.xlu0 %1873
      %1875 = vrot.lane.b32.xlu0 %v1801, 8
      %v1876 = vpop.permute.xlu0 %1875
      %1877 = vrot.lane.b32.xlu0 %v1802, 8
      %v1878 = vpop.permute.xlu0 %1877
      %1879 = vrot.lane.b32.xlu0 %v1803, 8
      %v1880 = vpop.permute.xlu0 %1879
      %1881 = vrot.lane.b32.xlu0 %v1804, 8
      %v1882 = vpop.permute.xlu0 %1881
      %1883 = vrot.lane.b32.xlu0 %v1805, 8
      %v1884 = vpop.permute.xlu0 %1883
      %1885 = vrot.lane.b32.xlu0 %v1806, 8
      %v1886 = vpop.permute.xlu0 %1885
      %1887 = vrot.lane.b32.xlu0 %v1807, 8
      %v1888 = vpop.permute.xlu0 %1887
      %1905 = vrot.lane.b32.xlu0 %v1808, 16
      %v1906 = vpop.permute.xlu0 %1905
      %1907 = vrot.lane.b32.xlu0 %v1809, 16
      %v1908 = vpop.permute.xlu0 %1907
      %1909 = vrot.lane.b32.xlu0 %v1810, 16
      %v1910 = vpop.permute.xlu0 %1909
      %1911 = vrot.lane.b32.xlu0 %v1811, 16
      %v1912 = vpop.permute.xlu0 %1911
      %1913 = vrot.lane.b32.xlu0 %v1812, 16
      %v1914 = vpop.permute.xlu0 %1913
      %1915 = vrot.lane.b32.xlu0 %v1813, 16
      %v1916 = vpop.permute.xlu0 %1915
      %1917 = vrot.lane.b32.xlu0 %v1814, 16
      %v1918 = vpop.permute.xlu0 %1917
      %1919 = vrot.lane.b32.xlu0 %v1815, 16
      %v1920 = vpop.permute.xlu0 %1919
      %1937 = vrot.lane.b32.xlu0 %v1816, 24
      %v1938 = vpop.permute.xlu0 %1937
      %1939 = vrot.lane.b32.xlu0 %v1817, 24
      %v1940 = vpop.permute.xlu0 %1939
      %1941 = vrot.lane.b32.xlu0 %v1818, 24
      %v1942 = vpop.permute.xlu0 %1941
      %1943 = vrot.lane.b32.xlu0 %v1819, 24
      %v1944 = vpop.permute.xlu0 %1943
      %1945 = vrot.lane.b32.xlu0 %v1820, 24
      %v1946 = vpop.permute.xlu0 %1945
      %1947 = vrot.lane.b32.xlu0 %v1821, 24
      %v1948 = vpop.permute.xlu0 %1947
      %1949 = vrot.lane.b32.xlu0 %v1822, 24
      %v1950 = vpop.permute.xlu0 %1949
      %1951 = vrot.lane.b32.xlu0 %v1823, 24
      %v1952 = vpop.permute.xlu0 %1951
      %1969 = vrot.lane.b32.xlu0 %v1824, 32
      %v1970 = vpop.permute.xlu0 %1969
      %1971 = vrot.lane.b32.xlu0 %v1825, 32
      %v1972 = vpop.permute.xlu0 %1971
      %1973 = vrot.lane.b32.xlu0 %v1826, 32
      %v1974 = vpop.permute.xlu0 %1973
      %1975 = vrot.lane.b32.xlu0 %v1827, 32
      %v1976 = vpop.permute.xlu0 %1975
      %1977 = vrot.lane.b32.xlu0 %v1828, 32
      %v1978 = vpop.permute.xlu0 %1977
      %1979 = vrot.lane.b32.xlu0 %v1829, 32
      %v1980 = vpop.permute.xlu0 %1979
      %1981 = vrot.lane.b32.xlu0 %v1830, 32
      %v1982 = vpop.permute.xlu0 %1981
      %1983 = vrot.lane.b32.xlu0 %v1831, 32
      %v1984 = vpop.permute.xlu0 %1983
      %2001 = vrot.lane.b32.xlu0 %v1832, 40
      %v2002 = vpop.permute.xlu0 %2001
      %2003 = vrot.lane.b32.xlu0 %v1833, 40
      %v2004 = vpop.permute.xlu0 %2003
      %2005 = vrot.lane.b32.xlu0 %v1834, 40
      %v2006 = vpop.permute.xlu0 %2005
      %2007 = vrot.lane.b32.xlu0 %v1835, 40
      %v2008 = vpop.permute.xlu0 %2007
      %2009 = vrot.lane.b32.xlu0 %v1836, 40
      %v2010 = vpop.permute.xlu0 %2009
      %2011 = vrot.lane.b32.xlu0 %v1837, 40
      %v2012 = vpop.permute.xlu0 %2011
      %2013 = vrot.lane.b32.xlu0 %v1838, 40
      %v2014 = vpop.permute.xlu0 %2013
      %2015 = vrot.lane.b32.xlu0 %v1839, 40
      %v2016 = vpop.permute.xlu0 %2015
      %2033 = vrot.lane.b32.xlu0 %v1841, 48
      %v2034 = vpop.permute.xlu0 %2033
      %2035 = vrot.lane.b32.xlu0 %v1842, 48
      %v2036 = vpop.permute.xlu0 %2035
      %2037 = vrot.lane.b32.xlu0 %v1843, 48
      %v2038 = vpop.permute.xlu0 %2037
      %2039 = vrot.lane.b32.xlu0 %v1844, 48
      %v2040 = vpop.permute.xlu0 %2039
      %2041 = vrot.lane.b32.xlu0 %v1845, 48
      %v2042 = vpop.permute.xlu0 %2041
      %2043 = vrot.lane.b32.xlu0 %v1846, 48
      %v2044 = vpop.permute.xlu0 %2043
      %2045 = vrot.lane.b32.xlu0 %v1847, 48
      %v2046 = vpop.permute.xlu0 %2045
      %2047 = vrot.lane.b32.xlu0 %v1848, 48
      %v2048 = vpop.permute.xlu0 %2047
      %2065 = vrot.lane.b32.xlu0 %v1849, 56
      %v2066 = vpop.permute.xlu0 %2065
      %2067 = vrot.lane.b32.xlu0 %v1850, 56
      %v2068 = vpop.permute.xlu0 %2067
      %2069 = vrot.lane.b32.xlu0 %v1851, 56
      %v2070 = vpop.permute.xlu0 %2069
      %2071 = vrot.lane.b32.xlu0 %v1852, 56
      %v2072 = vpop.permute.xlu0 %2071
      %2073 = vrot.lane.b32.xlu0 %v1853, 56
      %v2074 = vpop.permute.xlu0 %2073
      %2075 = vrot.lane.b32.xlu0 %v1854, 56
      %v2076 = vpop.permute.xlu0 %2075
      %2077 = vrot.lane.b32.xlu0 %v1855, 56
      %v2078 = vpop.permute.xlu0 %2077
      %2079 = vrot.lane.b32.xlu0 %v1856, 56
      %v2080 = vpop.permute.xlu0 %2079
      %2097 = vrot.lane.b32.xlu0 %v1857, 64
      %v2098 = vpop.permute.xlu0 %2097
      %2099 = vrot.lane.b32.xlu0 %v1858, 64
      %v2100 = vpop.permute.xlu0 %2099
      %2101 = vrot.lane.b32.xlu0 %v1859, 64
      %v2102 = vpop.permute.xlu0 %2101
      %2103 = vrot.lane.b32.xlu0 %v1860, 64
      %v2104 = vpop.permute.xlu0 %2103
      %2105 = vrot.lane.b32.xlu0 %v1861, 64
      %v2106 = vpop.permute.xlu0 %2105
      %2107 = vrot.lane.b32.xlu0 %v1862, 64
      %v2108 = vpop.permute.xlu0 %2107
      %2109 = vrot.lane.b32.xlu0 %v1863, 64
      %v2110 = vpop.permute.xlu0 %2109
      %2111 = vrot.lane.b32.xlu0 %v1864, 64
      %v2112 = vpop.permute.xlu0 %2111
      %v2121 = vsel %vm580, %v1792, %v1874
      %v2122 = vsel %vm580, %v1793, %v1876
      %v2123 = vsel %vm580, %v1794, %v1878
      %v2124 = vsel %vm580, %v1795, %v1880
      %v2125 = vsel %vm580, %v1796, %v1882
      %v2126 = vsel %vm580, %v1797, %v1884
      %v2127 = vsel %vm580, %v1798, %v1886
      %v2128 = vsel %vm580, %v1799, %v1888
      %v2129 = vsel %vm982, %v2121, %v1906
      %v2130 = vsel %vm982, %v2122, %v1908
      %v2131 = vsel %vm982, %v2123, %v1910
      %v2132 = vsel %vm982, %v2124, %v1912
      %v2133 = vsel %vm982, %v2125, %v1914
      %v2134 = vsel %vm982, %v2126, %v1916
      %v2135 = vsel %vm982, %v2127, %v1918
      %v2136 = vsel %vm982, %v2128, %v1920
      %v2137 = vsel %vm1000, %v2129, %v1938
      %v2138 = vsel %vm1000, %v2130, %v1940
      %v2139 = vsel %vm1000, %v2131, %v1942
      %v2140 = vsel %vm1000, %v2132, %v1944
      %v2141 = vsel %vm1000, %v2133, %v1946
      %v2142 = vsel %vm1000, %v2134, %v1948
      %v2143 = vsel %vm1000, %v2135, %v1950
      %v2144 = vsel %vm1000, %v2136, %v1952
      %v2145 = vsel %vm480, %v2137, %v1970
      %v2146 = vsel %vm480, %v2138, %v1972
      %v2147 = vsel %vm480, %v2139, %v1974
      %v2148 = vsel %vm480, %v2140, %v1976
      %v2149 = vsel %vm480, %v2141, %v1978
      %v2150 = vsel %vm480, %v2142, %v1980
      %v2151 = vsel %vm480, %v2143, %v1982
      %v2152 = vsel %vm480, %v2144, %v1984
      %vm2153 = vcmask 326656
      %v2154 = vsel %vm2153, %v2145, %v2002
      %v2155 = vsel %vm2153, %v2146, %v2004
      %v2156 = vsel %vm2153, %v2147, %v2006
      %v2157 = vsel %vm2153, %v2148, %v2008
      %v2158 = vsel %vm2153, %v2149, %v2010
      %v2159 = vsel %vm2153, %v2150, %v2012
      %v2160 = vsel %vm2153, %v2151, %v2014
      %v2161 = vsel %vm2153, %v2152, %v2016
      %vm2162 = vcmask 392192
      %v2163 = vsel %vm2162, %v2154, %v2034
      %v2164 = vsel %vm2162, %v2155, %v2036
      %v2165 = vsel %vm2162, %v2156, %v2038
      %v2166 = vsel %vm2162, %v2157, %v2040
      %v2167 = vsel %vm2162, %v2158, %v2042
      %v2168 = vsel %vm2162, %v2159, %v2044
      %v2169 = vsel %vm2162, %v2160, %v2046
      %v2170 = vsel %vm2162, %v2161, %v2048
      %vm2171 = vcmask 457728
      %v2172 = vsel %vm2171, %v2163, %v2066
      %v2173 = vsel %vm2171, %v2164, %v2068
      %v2174 = vsel %vm2171, %v2165, %v2070
      %v2175 = vsel %vm2171, %v2166, %v2072
      %v2176 = vsel %vm2171, %v2167, %v2074
      %v2177 = vsel %vm2171, %v2168, %v2076
      %v2178 = vsel %vm2171, %v2169, %v2078
      %v2179 = vsel %vm2171, %v2170, %v2080
      %v2180 = vsel %vm1308, %v2172, %v2098
      %v2181 = vsel %vm1308, %v2173, %v2100
      %v2182 = vsel %vm1308, %v2174, %v2102
      %v2183 = vsel %vm1308, %v2175, %v2104
      %v2184 = vsel %vm1308, %v2176, %v2106
      %v2185 = vsel %vm1308, %v2177, %v2108
      %v2186 = vsel %vm1308, %v2178, %v2110
      %v2187 = vsel %vm1308, %v2179, %v2112
      %v2188 = vpack.c.bf16 %v2181, %v2180
      %v2189 = vpack.c.bf16 %v2183, %v2182
      %v2190 = vpack.c.bf16 %v2185, %v2184
      %v2191 = vpack.c.bf16 %v2187, %v2186
      %v2192 = vld [vmem:[%s6] sm:$0xf]
      %v2193 = vld [vmem:[%s6 + $0x4] sm:$0xf]
      %v2194 = vld [vmem:[%s6 + $0x8] sm:$0xf]
      %v2195 = vld [vmem:[%s6 + $0xc] sm:$0xf]
      %v2196 = vld [vmem:[%s6 + $0x10] sm:$0xf]
      %v2197 = vld [vmem:[%s6 + $0x14] sm:$0xf]
      %v2198 = vld [vmem:[%s6 + $0x18] sm:$0xf]
      %v2199 = vld [vmem:[%s6 + $0x1c] sm:$0xf]
      %v2200 = vld [vmem:[%s6 + $0x20] sm:$0xf]
      %v2210 = vunpack.c.l.b16 %v2192
      %v2211 = vunpack.c.l.b16 %v2193
      %v2212 = vunpack.c.l.b16 %v2194
      %v2213 = vunpack.c.l.b16 %v2195
      %v2214 = vunpack.c.l.b16 %v2196
      %v2215 = vunpack.c.l.b16 %v2197
      %v2216 = vunpack.c.l.b16 %v2198
      %v2217 = vunpack.c.l.b16 %v2199
      %v2218 = vunpack.c.l.b16 %v2200
      %v2219 = vpack.c.b16 %v2211, %v2210
      %v2220 = vpack.c.b16 %v2213, %v2212
      %v2221 = vpack.c.b16 %v2215, %v2214
      %v2222 = vpack.c.b16 %v2217, %v2216
      %v2223 = vpack.c.b16 %v2218, %v2218
      %vm2228 = vcmask 588800
      %v2230 = vsel %vm2228, %v2188, 0
      %v2233 = vsel %vm2228, %v2189, 0
      %v2236 = vsel %vm2228, %v2190, 0
      %v2239 = vsel %vm2228, %v2191, 0
      %vm2241 = vcmask 1043456
      %v2243 = vsel %vm2241, %v2223, 0
      %2245 = vmatprep.subr.bf16.mxu0 0
      %2246 = vmatpush1.bf16.msra.mxu0 0
      %2247 = vmatprep.subr.bf16.mxu0 0
      %2248 = vmatpush1.bf16.msra.mxu0 0
      %2249 = vmatprep.subr.bf16.mxu0 0
      %2250 = vmatpush1.bf16.msra.mxu0 0
      %2251 = vmatprep.subr.bf16.mxu0 0
      %2252 = vmatpush1.bf16.msra.mxu0 %v2243
      %2253 = vmatprep.subr.bf16.mxu0 0
      %2254 = vmatpush1.bf16.msra.mxu0 %v2222
      %2255 = vmatprep.subr.bf16.mxu0 0
      %2256 = vmatpush1.bf16.msra.mxu0 %v2221
      %2257 = vmatprep.subr.bf16.mxu0 0
      %2258 = vmatpush1.bf16.msra.mxu0 %v2220
      %2259 = vmatprep.subr.bf16.mxu0 0
      %2260 = vmatpush1.bf16.msra.mxu0 %v2219
      %2261 = vmatprep.subr.bf16.mxu0 0
      %2262 = vmatpush2.bf16.msra.mxu0 0
      %2263 = vmatprep.subr.bf16.mxu0 0
      %2264 = vmatpush2.bf16.msra.mxu0 0
      %2265 = vmatprep.subr.bf16.mxu0 0
      %2266 = vmatpush2.bf16.msra.mxu0 0
      %2267 = vmatprep.subr.bf16.mxu0 0
      %2268 = vmatpush2.bf16.msra.mxu0 0
      %2269 = vmatprep.subr.bf16.mxu0 0
      %2270 = vmatpush2.bf16.msra.mxu0 0
      %2271 = vmatprep.subr.bf16.mxu0 0
      %2272 = vmatpush2.bf16.msra.mxu0 0
      %2273 = vmatprep.subr.bf16.mxu0 0
      %2274 = vmatpush2.bf16.msra.mxu0 0
      %2275 = vmatprep.subr.bf16.mxu0 0
      %2276 = vmatpush2.bf16.msra.mxu0 0
      %2277 = vmatprep.mubr.bf16.mxu0 0
      %2278 = vmatmul.mubr.bf16.gmra.mxu0 %v2230
      %v2279 = vpop.f32.mrf.mxu0
      %v2280 = vadd.f32 0.0, %v2279
      %v2281 = vpop.f32.mrf.mxu0
      %v2282 = vpop.f32.mrf.mxu0
      %v2283 = vadd.f32 0.0, %v2282
      %v2284 = vpop.f32.mrf.mxu0
      %2285 = vmatprep.mubr.bf16.mxu0 0
      %2286 = vmatmul.mubr.bf16.gmra.mxu0 %v2233
      %v2287 = vpop.f32.mrf.mxu0
      %v2288 = vadd.f32 0.0, %v2287
      %v2289 = vpop.f32.mrf.mxu0
      %v2290 = vpop.f32.mrf.mxu0
      %v2291 = vadd.f32 0.0, %v2290
      %v2292 = vpop.f32.mrf.mxu0
      %2293 = vmatprep.mubr.bf16.mxu0 0
      %2294 = vmatmul.mubr.bf16.gmra.mxu0 %v2236
      %v2295 = vpop.f32.mrf.mxu0
      %v2296 = vadd.f32 0.0, %v2295
      %v2297 = vpop.f32.mrf.mxu0
      %v2298 = vpop.f32.mrf.mxu0
      %v2299 = vadd.f32 0.0, %v2298
      %v2300 = vpop.f32.mrf.mxu0
      %2301 = vmatprep.mubr.bf16.mxu0 0
      %2302 = vmatmul.mubr.bf16.gmra.mxu0 %v2239
      %v2303 = vpop.f32.mrf.mxu0
      %v2304 = vadd.f32 0.0, %v2303
      %v2305 = vpop.f32.mrf.mxu0
      %v2306 = vpop.f32.mrf.mxu0
      %v2307 = vadd.f32 0.0, %v2306
      %v2308 = vpop.f32.mrf.mxu0
      %2309 = vdwg.mxu0
      %v2310 = vld [vmem:[%s7] sm:$0x1]
      %v2311 = vld [vmem:[%s8] sm:$0x1]
      %v2313 = vlaneseq
      %v2314 = vshrl.u32 %v2313, 7
      %v2315 = vsub.s32 0, %v2314
      %v2316 = vrot.slane %v2310, %v2315
      %v2318 = vmul.f32 %v2280, %v2316
      %v2319 = vmul.f32 %v2283, %v2316
      %v2320 = vmul.f32 %v2288, %v2316
      %v2321 = vmul.f32 %v2291, %v2316
      %v2322 = vmul.f32 %v2296, %v2316
      %v2323 = vmul.f32 %v2299, %v2316
      %v2324 = vmul.f32 %v2304, %v2316
      %v2325 = vmul.f32 %v2307, %v2316
      %v2327 = vlaneseq
      %v2328 = vshrl.u32 %v2327, 7
      %v2329 = vsub.s32 0, %v2328
      %v2330 = vrot.slane %v2311, %v2329
      %v2332 = vadd.f32 %v2318, %v2330
      %v2333 = vadd.f32 %v2319, %v2330
      %v2334 = vadd.f32 %v2320, %v2330
      %v2335 = vadd.f32 %v2321, %v2330
      %v2336 = vadd.f32 %v2322, %v2330
      %v2337 = vadd.f32 %v2323, %v2330
      %v2338 = vadd.f32 %v2324, %v2330
      %v2339 = vadd.f32 %v2325, %v2330
      %v2340 = vmax.f32 %v2332, 0.0
      %v2341 = vmax.f32 %v2333, 0.0
      %v2342 = vmax.f32 %v2334, 0.0
      %v2343 = vmax.f32 %v2335, 0.0
      %v2344 = vmax.f32 %v2336, 0.0
      %v2345 = vmax.f32 %v2337, 0.0
      %v2346 = vmax.f32 %v2338, 0.0
      %v2347 = vmax.f32 %v2339, 0.0
      %2348 = vst.msk [vmem:[%s441] sm:$0xff] %vm580, %v2340
      %2349 = vst.msk [vmem:[%s441 + $0x8] sm:$0xff] %vm580, %v2341
      %2350 = vst.msk [vmem:[%s441 + $0x10] sm:$0xff] %vm580, %v2342
      %2351 = vst.msk [vmem:[%s441 + $0x18] sm:$0xff] %vm580, %v2343
      %2352 = vst.msk [vmem:[%s441 + $0x20] sm:$0xff] %vm580, %v2344
      %2353 = vst.msk [vmem:[%s441 + $0x28] sm:$0xff] %vm580, %v2345
      %2354 = vst.msk [vmem:[%s441 + $0x30] sm:$0xff] %vm580, %v2346
      %2355 = vst.msk [vmem:[%s441 + $0x38] sm:$0xff] %vm580, %v2347
      %v2356 = vld [vmem:[%s9] sm:$0xff]
      %v2357 = vld [vmem:[%s10] sm:$0x1]
      %v2359 = vlaneseq
      %v2360 = vshrl.u32 %v2359, 7
      %v2361 = vsub.s32 0, %v2360
      %v2362 = vrot.slane %v2357, %v2361
      %v2365 = vsel %vm580, %v2340, 0
      %v2368 = vsel %vm580, %v2341, 0
      %v2371 = vsel %vm580, %v2342, 0
      %v2374 = vsel %vm580, %v2343, 0
      %v2377 = vsel %vm580, %v2344, 0
      %v2380 = vsel %vm580, %v2345, 0
      %v2383 = vsel %vm580, %v2346, 0
      %v2386 = vsel %vm580, %v2347, 0
      %2388 = vmatprep.subr.mxu0 0.0
      %2389 = vmatpush1.msra.mxu0 0.0
      %2390 = vmatprep.subr.mxu0 0.0
      %2391 = vmatpush1.msra.mxu0 0.0
      %2392 = vmatprep.subr.mxu0 0.0
      %2393 = vmatpush1.msra.mxu0 0.0
      %2394 = vmatprep.subr.mxu0 0.0
      %2395 = vmatpush1.msra.mxu0 0.0
      %2396 = vmatprep.subr.mxu0 0.0
      %2397 = vmatpush1.msra.mxu0 0.0
      %2398 = vmatprep.subr.mxu0 0.0
      %2399 = vmatpush1.msra.mxu0 0.0
      %2400 = vmatprep.subr.mxu0 0.0
      %2401 = vmatpush1.msra.mxu0 0.0
      %2402 = vmatprep.subr.mxu0 0.0
      %2403 = vmatpush1.msra.mxu0 0.0
      %2404 = vmatprep.subr.mxu0 0.0
      %2405 = vmatpush1.msra.mxu0 0.0
      %2406 = vmatprep.subr.mxu0 0.0
      %2407 = vmatpush1.msra.mxu0 0.0
      %2408 = vmatprep.subr.mxu0 0.0
      %2409 = vmatpush1.msra.mxu0 0.0
      %2410 = vmatprep.subr.mxu0 0.0
      %2411 = vmatpush1.msra.mxu0 0.0
      %2412 = vmatprep.subr.mxu0 0.0
      %2413 = vmatpush1.msra.mxu0 0.0
      %2414 = vmatprep.subr.mxu0 0.0
      %2415 = vmatpush1.msra.mxu0 0.0
      %2416 = vmatprep.subr.mxu0 0.0
      %2417 = vmatpush1.msra.mxu0 0.0
      %2418 = vmatprep.subr.mxu0 0.0
      %2419 = vmatpush1.msra.mxu0 %v2356
      %2420 = vmatprep.subr.mxu0 0.0
      %2421 = vmatpush2.msra.mxu0 0.0
      %2422 = vmatprep.subr.mxu0 0.0
      %2423 = vmatpush2.msra.mxu0 0.0
      %2424 = vmatprep.subr.mxu0 0.0
      %2425 = vmatpush2.msra.mxu0 0.0
      %2426 = vmatprep.subr.mxu0 0.0
      %2427 = vmatpush2.msra.mxu0 0.0
      %2428 = vmatprep.subr.mxu0 0.0
      %2429 = vmatpush2.msra.mxu0 0.0
      %2430 = vmatprep.subr.mxu0 0.0
      %2431 = vmatpush2.msra.mxu0 0.0
      %2432 = vmatprep.subr.mxu0 0.0
      %2433 = vmatpush2.msra.mxu0 0.0
      %2434 = vmatprep.subr.mxu0 0.0
      %2435 = vmatpush2.msra.mxu0 0.0
      %2436 = vmatprep.subr.mxu0 0.0
      %2437 = vmatpush2.msra.mxu0 0.0
      %2438 = vmatprep.subr.mxu0 0.0
      %2439 = vmatpush2.msra.mxu0 0.0
      %2440 = vmatprep.subr.mxu0 0.0
      %2441 = vmatpush2.msra.mxu0 0.0
      %2442 = vmatprep.subr.mxu0 0.0
      %2443 = vmatpush2.msra.mxu0 0.0
      %2444 = vmatprep.subr.mxu0 0.0
      %2445 = vmatpush2.msra.mxu0 0.0
      %2446 = vmatprep.subr.mxu0 0.0
      %2447 = vmatpush2.msra.mxu0 0.0
      %2448 = vmatprep.subr.mxu0 0.0
      %2449 = vmatpush2.msra.mxu0 0.0
      %2450 = vmatprep.subr.mxu0 0.0
      %2451 = vmatpush2.msra.mxu0 0.0
      %2452 = vmatprep.mubr.f32.mxu0 0.0
      %2453 = vmatmul.mubr.f32.gmra.mxu0 %v2365
      %v2454 = vpop.f32.mrf.mxu0
      %v2455 = vadd.f32 %v2362, %v2454
      %v2456 = vpop.f32.mrf.mxu0
      %2457 = vmatprep.mubr.f32.mxu0 0.0
      %2458 = vmatmul.mubr.f32.gmra.mxu0 %v2368
      %v2459 = vpop.f32.mrf.mxu0
      %v2460 = vadd.f32 %v2362, %v2459
      %v2461 = vpop.f32.mrf.mxu0
      %2462 = vmatprep.mubr.f32.mxu0 0.0
      %2463 = vmatmul.mubr.f32.gmra.mxu0 %v2371
      %v2464 = vpop.f32.mrf.mxu0
      %v2465 = vadd.f32 %v2362, %v2464
      %v2466 = vpop.f32.mrf.mxu0
      %2467 = vmatprep.mubr.f32.mxu0 0.0
      %2468 = vmatmul.mubr.f32.gmra.mxu0 %v2374
      %v2469 = vpop.f32.mrf.mxu0
      %v2470 = vadd.f32 %v2362, %v2469
      %v2471 = vpop.f32.mrf.mxu0
      %2472 = vmatprep.mubr.f32.mxu0 0.0
      %2473 = vmatmul.mubr.f32.gmra.mxu0 %v2377
      %v2474 = vpop.f32.mrf.mxu0
      %v2475 = vadd.f32 %v2362, %v2474
      %v2476 = vpop.f32.mrf.mxu0
      %2477 = vmatprep.mubr.f32.mxu0 0.0
      %2478 = vmatmul.mubr.f32.gmra.mxu0 %v2380
      %v2479 = vpop.f32.mrf.mxu0
      %v2480 = vadd.f32 %v2362, %v2479
      %v2481 = vpop.f32.mrf.mxu0
      %2482 = vmatprep.mubr.f32.mxu0 0.0
      %2483 = vmatmul.mubr.f32.gmra.mxu0 %v2383
      %v2484 = vpop.f32.mrf.mxu0
      %v2485 = vadd.f32 %v2362, %v2484
      %v2486 = vpop.f32.mrf.mxu0
      %2487 = vmatprep.mubr.f32.mxu0 0.0
      %2488 = vmatmul.mubr.f32.gmra.mxu0 %v2386
      %v2489 = vpop.f32.mrf.mxu0
      %v2490 = vadd.f32 %v2362, %v2489
      %v2491 = vpop.f32.mrf.mxu0
      %2492 = vdwg.mxu0
      %v2493 = vadd.f32 %v448, %v2455
      %v2494 = vadd.f32 %v449, %v2460
      %v2495 = vadd.f32 %v450, %v2465
      %v2496 = vadd.f32 %v451, %v2470
      %v2497 = vadd.f32 %v452, %v2475
      %v2498 = vadd.f32 %v453, %v2480
      %v2499 = vadd.f32 %v454, %v2485
      %v2500 = vadd.f32 %v455, %v2490
      %v2501 = vadd.f32 %v456, %v2455
      %v2502 = vadd.f32 %v457, %v2460
      %v2503 = vadd.f32 %v458, %v2465
      %v2504 = vadd.f32 %v459, %v2470
      %v2505 = vadd.f32 %v460, %v2475
      %v2506 = vadd.f32 %v461, %v2480
      %v2507 = vadd.f32 %v462, %v2485
      %v2508 = vadd.f32 %v463, %v2490
      %v2509 = vadd.f32 %v464, %v2455
      %v2510 = vadd.f32 %v465, %v2460
      %v2511 = vadd.f32 %v466, %v2465
      %v2512 = vadd.f32 %v467, %v2470
      %v2513 = vadd.f32 %v468, %v2475
      %v2514 = vadd.f32 %v469, %v2480
      %v2515 = vadd.f32 %v470, %v2485
      %v2516 = vadd.f32 %v471, %v2490
      %v2517 = vadd.f32 %v472, %v2455
      %v2518 = vadd.f32 %v473, %v2460
      %v2519 = vadd.f32 %v474, %v2465
      %v2520 = vadd.f32 %v475, %v2470
      %v2521 = vadd.f32 %v476, %v2475
      %v2522 = vadd.f32 %v477, %v2480
      %v2523 = vadd.f32 %v478, %v2485
      %v2524 = vadd.f32 %v479, %v2490
      %2525 = vst.msk [vmem:[%s446] sm:$0xff] %vm480, %v2493
      %2526 = vst.msk [vmem:[%s446 + $0x8] sm:$0xff] %vm480, %v2494
      %2527 = vst.msk [vmem:[%s446 + $0x10] sm:$0xff] %vm480, %v2495
      %2528 = vst.msk [vmem:[%s446 + $0x18] sm:$0xff] %vm480, %v2496
      %2529 = vst.msk [vmem:[%s446 + $0x20] sm:$0xff] %vm480, %v2497
      %2530 = vst.msk [vmem:[%s446 + $0x28] sm:$0xff] %vm480, %v2498
      %2531 = vst.msk [vmem:[%s446 + $0x30] sm:$0xff] %vm480, %v2499
      %2532 = vst.msk [vmem:[%s446 + $0x38] sm:$0xff] %vm480, %v2500
      %2533 = vst.msk [vmem:[%s446 + $0x40] sm:$0xff] %vm480, %v2501
      %2534 = vst.msk [vmem:[%s446 + $0x48] sm:$0xff] %vm480, %v2502
      %2535 = vst.msk [vmem:[%s446 + $0x50] sm:$0xff] %vm480, %v2503
      %2536 = vst.msk [vmem:[%s446 + $0x58] sm:$0xff] %vm480, %v2504
      %2537 = vst.msk [vmem:[%s446 + $0x60] sm:$0xff] %vm480, %v2505
      %2538 = vst.msk [vmem:[%s446 + $0x68] sm:$0xff] %vm480, %v2506
      %2539 = vst.msk [vmem:[%s446 + $0x70] sm:$0xff] %vm480, %v2507
      %2540 = vst.msk [vmem:[%s446 + $0x78] sm:$0xff] %vm480, %v2508
      %2541 = vst.msk [vmem:[%s446 + $0x80] sm:$0xff] %vm480, %v2509
      %2542 = vst.msk [vmem:[%s446 + $0x88] sm:$0xff] %vm480, %v2510
      %2543 = vst.msk [vmem:[%s446 + $0x90] sm:$0xff] %vm480, %v2511
      %2544 = vst.msk [vmem:[%s446 + $0x98] sm:$0xff] %vm480, %v2512
      %2545 = vst.msk [vmem:[%s446 + $0xa0] sm:$0xff] %vm480, %v2513
      %2546 = vst.msk [vmem:[%s446 + $0xa8] sm:$0xff] %vm480, %v2514
      %2547 = vst.msk [vmem:[%s446 + $0xb0] sm:$0xff] %vm480, %v2515
      %2548 = vst.msk [vmem:[%s446 + $0xb8] sm:$0xff] %vm480, %v2516
      %2549 = vst.msk [vmem:[%s446 + $0xc0] sm:$0xff] %vm480, %v2517
      %2550 = vst.msk [vmem:[%s446 + $0xc8] sm:$0xff] %vm480, %v2518
      %2551 = vst.msk [vmem:[%s446 + $0xd0] sm:$0xff] %vm480, %v2519
      %2552 = vst.msk [vmem:[%s446 + $0xd8] sm:$0xff] %vm480, %v2520
      %2553 = vst.msk [vmem:[%s446 + $0xe0] sm:$0xff] %vm480, %v2521
      %2554 = vst.msk [vmem:[%s446 + $0xe8] sm:$0xff] %vm480, %v2522
      %2555 = vst.msk [vmem:[%s446 + $0xf0] sm:$0xff] %vm480, %v2523
      %2556 = vst.msk [vmem:[%s446 + $0xf8] sm:$0xff] %vm480, %v2524
      %p2557 = scmp.lt.s32.totalorder %s24, 1
      %s2558 = scalar_select %p2557, %s24, 1
      %s2559 = smul.addr %s2558, 8
      %s2560 = smul.addr %s2559, 8
      %s2561 = scalar_lea.vmem %s11, %s2560
      %p2562 = scmp.lt.s32.totalorder %s24, 1
      %s2563 = scalar_select %p2562, %s24, 1
      %s2564 = smul.addr %s2563, 32
      %s2565 = smul.addr %s2564, 8
      %s2566 = scalar_lea.vmem %s12, %s2565
      // Predicated region
      $region65: #{frru_forward.1} parent=63 // pred_check
        %p2567 = pneg %p283
      $region66: #{frru_forward.1} parent=63 // pred_check_branch
        %2569 = sbr.rel (%p2567) target = $region68
      $region67: #{frru_forward.1} parent=63 // pred_region
        _
      $region68: #{frru_forward.1} parent=63 // pred_fallthru
        _
      // Predicated region
      $region69: #{frru_forward.1} parent=63 // pred_check
        %p2570 = pneg %p309
      $region70: #{frru_forward.1} parent=63 // pred_check_branch
        %2572 = sbr.rel (%p2570) target = $region72
      $region71: #{frru_forward.1} parent=63 // pred_region
        _
      $region72: #{frru_forward.1} parent=63 // pred_fallthru
        _
    $region64: #{frru_forward.1} parent=5 // pred_fallthru
      _
    %p2573 = scmp.le.s32.totalorder 2, %s19
    // Predicated region
    $region73: #{frru_forward.1} parent=5 // pred_check
      %p2574 = pneg %p2573
    $region74: #{frru_forward.1} parent=5 // pred_check_branch
      %2576 = sbr.rel (%p2574) target = $region76
    $region75: #{frru_forward.1} parent=5 // pred_region
      %s2577 = ssub.s32 %s19, 2
      // Predicated region
      $region77: #{frru_forward.1} parent=75 // pred_check
        %p2578 = pneg %p289
      $region78: #{frru_forward.1} parent=75 // pred_check_branch
        %2580 = sbr.rel (%p2578) target = $region80
      $region79: #{frru_forward.1} parent=75 // pred_region
        %p2581 = scmp.lt.s32.totalorder %s25, 1
        %s2582 = scalar_select %p2581, %s25, 1
        %s2583 = smul.addr %s2582, 8
        %s2584 = smul.addr %s2583, 8
        %s2585 = scalar_lea.vmem %s11, %s2584
      $region80: #{frru_forward.1} parent=75 // pred_fallthru
        _
      // Predicated region
      $region81: #{frru_forward.1} parent=75 // pred_check
        %p2586 = pneg %p315
      $region82: #{frru_forward.1} parent=75 // pred_check_branch
        %2588 = sbr.rel (%p2586) target = $region84
      $region83: #{frru_forward.1} parent=75 // pred_region
        %p2589 = scmp.lt.s32.totalorder %s25, 1
        %s2590 = scalar_select %p2589, %s25, 1
        %s2591 = smul.addr %s2590, 32
        %s2592 = smul.addr %s2591, 8
        %s2593 = scalar_lea.vmem %s12, %s2592
      $region84: #{frru_forward.1} parent=75 // pred_fallthru
        _
    $region76: #{frru_forward.1} parent=5 // pred_fallthru
      _
  $region6: #{frru_forward.1} parent=0 // loop_footer
    %s23 = sadd.s32 1, %s19
  $region7: #{frru_forward.1} parent=0 // loop_footer_branch
    %18 = sbr.rel target = $region3
  $region8: #{frru_forward.1} parent=0 // loop_exit
    _

</llo_original>
